<compile_context>
chip_gen: v7x
topology: tpu7x:2x2x1
jax: 0.10.0
libtpu: 0.0.40
codegen_flags: <defaults>
</compile_context>

<pallas_src>
import functools

import jax
import jax.numpy as jnp
from jax.experimental import pallas as pl
from jax.experimental.pallas import tpu as pltpu


_LN_EPS = 1e-5      # torch.nn.LayerNorm default
_NORM_EPS = 1e-12   # torch.nn.functional.normalize default


def _layernorm(h, gamma, beta, eps=_LN_EPS):
    # One-pass stats: independent sum / sum-of-squares reductions (shorter XLU
    # dependency chain than mean -> centered variance). Biased var, like torch.
    n = h.shape[-1]
    mean = jnp.sum(h, axis=-1, keepdims=True) * (1.0 / n)
    ex2 = jnp.sum(h * h, axis=-1, keepdims=True) * (1.0 / n)
    var = ex2 - mean * mean
    inv = jax.lax.rsqrt(var + eps)
    return (h - mean) * inv * gamma + beta


def _prelu(h, a):
    # PyTorch nn.PReLU() with a single shared slope `a`.
    return jnp.where(h >= 0, h, a * h)


def encoder_kernel(
    x_ref,
    w0_ref, b0_ref, g0_ref, be0_ref,
    w1_ref, b1_ref, g1_ref, be1_ref,
    w2_ref, b2_ref,
    prelu_ref,                       # SMEM (2,) f32: [slope_layer0, slope_layer1]
    o_ref,
):
    # ---- layer 0: Linear(input -> H) + LayerNorm + PReLU -------------------
    x_bf = x_ref[...].astype(jnp.bfloat16)
    h0 = jnp.dot(x_bf, w0_ref[...], preferred_element_type=jnp.float32)
    h0 = h0 + b0_ref[...]
    h0 = _prelu(_layernorm(h0, g0_ref[...], be0_ref[...]), prelu_ref[0])

    # ---- layer 1: Linear(H -> H) + LayerNorm + PReLU, residual add ---------
    h1 = jnp.dot(h0.astype(jnp.bfloat16), w1_ref[...],
                 preferred_element_type=jnp.float32)
    h1 = h1 + b1_ref[...]
    h1 = _prelu(_layernorm(h1, g1_ref[...], be1_ref[...]), prelu_ref[1]) + h0

    # ---- final layer: Linear(H -> latent) + L2 row normalization -----------
    z = jnp.dot(h1.astype(jnp.bfloat16), w2_ref[...],
                preferred_element_type=jnp.float32)
    z = z + b2_ref[...]
    ss = jnp.sum(z * z, axis=-1, keepdims=True)
    # z / max(||z||, eps)  ==  z * rsqrt(max(sum(z^2), eps^2))  (sqrt monotone)
    o_ref[...] = (z * jax.lax.rsqrt(jnp.maximum(ss, _NORM_EPS * _NORM_EPS))
                  ).astype(o_ref.dtype)


def encoder_cfg_forward(x, c, params, *, batch_tile=128):
    """Pallas forward for Encoder_cfg. `c` is unused (matches PyTorch forward)."""
    del c
    B, D_in = x.shape
    H0 = params["w0"].shape[1]
    H1 = params["w1"].shape[1]
    L = params["w2"].shape[1]

    batch_tile = min(batch_tile, B)
    assert B % batch_tile == 0, "batch must be a multiple of batch_tile"
    assert batch_tile % 8 == 0, "batch_tile must be a multiple of 8 (sublanes)"

    full = lambda shape: pl.BlockSpec(shape, lambda i: (0, 0))
    smem_spec = pl.BlockSpec(memory_space=pltpu.MemorySpace.SMEM)

    grid_spec = pltpu.PrefetchScalarGridSpec(
        num_scalar_prefetch=0,
        grid=(B // batch_tile,),
        in_specs=[
            pl.BlockSpec((batch_tile, D_in), lambda i: (i, 0)),             # x tile
            full((D_in, H0)), full((1, H0)), full((1, H0)), full((1, H0)),  # layer 0
            full((H0, H1)), full((1, H1)), full((1, H1)), full((1, H1)),    # layer 1
            full((H1, L)), full((1, L)),                                    # final linear
            smem_spec,                                                      # PReLU slopes
        ],
        out_specs=pl.BlockSpec((batch_tile, L), lambda i: (i, 0)),
    )

    weight_args = (
        params["w0"], params["b0"], params["g0"], params["be0"],
        params["w1"], params["b1"], params["g1"], params["be1"],
        params["w2"], params["b2"],
    )

    flops = 2 * B * (D_in * H0 + H0 * H1 + H1 * L)
    bytes_accessed = (
        int(x.size) * x.dtype.itemsize
        + sum(int(w.size) * w.dtype.itemsize for w in weight_args)
        + int(params["prelu"].size) * params["prelu"].dtype.itemsize
        + B * L * 4
    )
    cost = pl.CostEstimate(flops=int(flops), transcendentals=3 * B,
                           bytes_accessed=int(bytes_accessed))

    return pl.pallas_call(
        encoder_kernel,
        out_shape=jax.ShapeDtypeStruct((B, L), jnp.float32),
        grid_spec=grid_spec,
        compiler_params=pltpu.CompilerParams(
            dimension_semantics=("parallel",)),
        cost_estimate=cost,
    )(x, *weight_args, params["prelu"])


def init_params(key, input_dim, hidden_dim, latent_dim):
    """Deterministic init mirroring PyTorch defaults (uniform +/- 1/sqrt(fan_in))."""
    H0, H1 = hidden_dim
    assert H0 == H1, "fused kernel assumes the residual branch (hidden_dim[0]==hidden_dim[1])"
    ks = jax.random.split(key, 6)

    def linear(kw, kb, fan_in, fan_out):
        bound = 1.0 / jnp.sqrt(jnp.float32(fan_in))
        w = jax.random.uniform(kw, (fan_in, fan_out), jnp.float32, -bound, bound)
        b = jax.random.uniform(kb, (1, fan_out), jnp.float32, -bound, bound)
        return w, b

    w0, b0 = linear(ks[0], ks[1], input_dim, H0)
    w1, b1 = linear(ks[2], ks[3], H0, H1)
    w2, b2 = linear(ks[4], ks[5], H1, latent_dim)

    bf16 = jnp.bfloat16
    return dict(
        # Weights stored bf16 for the MXU + halved weight DMA; everything that
        # adds after the f32 accumulation stays f32.
        w0=w0.astype(bf16), b0=b0,
        g0=jnp.ones((1, H0), jnp.float32), be0=jnp.zeros((1, H0), jnp.float32),
        w1=w1.astype(bf16), b1=b1,
        g1=jnp.ones((1, H1), jnp.float32), be1=jnp.zeros((1, H1), jnp.float32),
        w2=w2.astype(bf16), b2=b2,
        prelu=jnp.full((2,), 0.25, jnp.float32),
    )


def reference_forward(x, params):
    """Pure-JAX reference with the same numeric recipe as the kernel
    (bf16 MXU inputs, f32 accumulation / LayerNorm / PReLU / L2-normalize)."""
    def ln(h, g, b, eps=_LN_EPS):
        n = h.shape[-1]
        mean = jnp.sum(h, axis=-1, keepdims=True) * (1.0 / n)
        ex2 = jnp.sum(h * h, axis=-1, keepdims=True) * (1.0 / n)
        return (h - mean) * jax.lax.rsqrt(ex2 - mean * mean + eps) * g + b

    def prelu(h, a):
        return jnp.where(h >= 0, h, a * h)

    def mm(a, w):
        return jnp.dot(a.astype(jnp.bfloat16), w, preferred_element_type=jnp.float32)

    h0 = prelu(ln(mm(x, params["w0"]) + params["b0"], params["g0"], params["be0"]),
               params["prelu"][0])
    h1 = prelu(ln(mm(h0, params["w1"]) + params["b1"], params["g1"], params["be1"]),
               params["prelu"][1]) + h0
    z = mm(h1, params["w2"]) + params["b2"]
    ss = jnp.sum(z * z, axis=-1, keepdims=True)
    return z * jax.lax.rsqrt(jnp.maximum(ss, _NORM_EPS * _NORM_EPS))


if __name__ == "__main__":
    # Small shapes consistent with Encoder_cfg.forward:
    #   x: (batch, input_dim), c: unused conditioning vector.
    # latent_dim = 128 keeps the output lane-dense; batch=256 with
    # batch_tile=128 gives a 2-step "parallel" grid (both cores on megacore /
    # dual-TC parts).
    batch, input_dim, latent_dim = 256, 64, 128
    hidden_dim = [128, 128]

    key = jax.random.PRNGKey(0)
    kx, kc, kp = jax.random.split(key, 3)
    x = jax.random.normal(kx, (batch, input_dim), jnp.float32)
    c = jax.random.normal(kc, (batch, 16), jnp.float32)  # unused, as in PyTorch forward

    params = init_params(kp, input_dim, hidden_dim, latent_dim)

    fwd = jax.jit(functools.partial(encoder_cfg_forward, batch_tile=128))
    out = jax.block_until_ready(fwd(x, c, params))

    ref = reference_forward(x, params)
    assert out.shape == (batch, latent_dim)
    # rows must be unit L2-norm (F.normalize semantics)
    assert jnp.allclose(jnp.linalg.norm(out, axis=1), 1.0, atol=1e-3), "rows not unit-norm"
    assert jnp.allclose(out, ref, atol=2e-3, rtol=2e-3), "mismatch vs. JAX reference"

    print("KERNEL_OK")
</pallas_src>

<mosaic_0001>
module attributes {stable_mosaic.version = 11 : i64} {
  func.func @encoder_kernel(%arg0: i32, %arg1: memref<128x64xf32, #tpu.memory_space<vmem>>, %arg2: memref<64x128xbf16, #tpu.memory_space<vmem>>, %arg3: memref<1x128xf32, #tpu.memory_space<vmem>>, %arg4: memref<1x128xf32, #tpu.memory_space<vmem>>, %arg5: memref<1x128xf32, #tpu.memory_space<vmem>>, %arg6: memref<128x128xbf16, #tpu.memory_space<vmem>>, %arg7: memref<1x128xf32, #tpu.memory_space<vmem>>, %arg8: memref<1x128xf32, #tpu.memory_space<vmem>>, %arg9: memref<1x128xf32, #tpu.memory_space<vmem>>, %arg10: memref<128x128xbf16, #tpu.memory_space<vmem>>, %arg11: memref<1x128xf32, #tpu.memory_space<vmem>>, %arg12: memref<2xf32, #tpu.memory_space<smem>>, %arg13: memref<128x128xf32, #tpu.memory_space<vmem>>) attributes {dimension_semantics = [#tpu.dimension_semantics<parallel>], iteration_bounds = array<i64: 2>, scalar_prefetch = 0 : i64, scratch_operands = 0 : i64, tpu.core_type = #tpu.core_type<tc>, window_params = [{transform_indices = @transform_0, window_bounds = array<i64: 128, 64>}, {pipeline_mode = #tpu.pipeline_mode<synchronous>, transform_indices = @transform_1, window_bounds = array<i64: 64, 128>}, {pipeline_mode = #tpu.pipeline_mode<synchronous>, transform_indices = @transform_2, window_bounds = array<i64: 1, 128>}, {pipeline_mode = #tpu.pipeline_mode<synchronous>, transform_indices = @transform_3, window_bounds = array<i64: 1, 128>}, {pipeline_mode = #tpu.pipeline_mode<synchronous>, transform_indices = @transform_4, window_bounds = array<i64: 1, 128>}, {pipeline_mode = #tpu.pipeline_mode<synchronous>, transform_indices = @transform_5, window_bounds = array<i64: 128, 128>}, {pipeline_mode = #tpu.pipeline_mode<synchronous>, transform_indices = @transform_6, window_bounds = array<i64: 1, 128>}, {pipeline_mode = #tpu.pipeline_mode<synchronous>, transform_indices = @transform_7, window_bounds = array<i64: 1, 128>}, {pipeline_mode = #tpu.pipeline_mode<synchronous>, transform_indices = @transform_8, window_bounds = array<i64: 1, 128>}, {pipeline_mode = #tpu.pipeline_mode<synchronous>, transform_indices = @transform_9, window_bounds = array<i64: 128, 128>}, {pipeline_mode = #tpu.pipeline_mode<synchronous>, transform_indices = @transform_10, window_bounds = array<i64: 1, 128>}, {transform_indices = @transform_11, window_bounds = array<i64: 2>}, {transform_indices = @transform_12, window_bounds = array<i64: 128, 128>}]} {
    %c0 = arith.constant 0 : index
    %c0_0 = arith.constant 0 : index
    %0 = vector.load %arg1[%c0, %c0_0] : memref<128x64xf32, #tpu.memory_space<vmem>>, vector<128x64xf32>
    %1 = arith.truncf %0 : vector<128x64xf32> to vector<128x64xbf16>
    %c0_1 = arith.constant 0 : index
    %c0_2 = arith.constant 0 : index
    %2 = vector.load %arg2[%c0_1, %c0_2] : memref<64x128xbf16, #tpu.memory_space<vmem>>, vector<64x128xbf16>
    %cst = arith.constant dense<0.000000e+00> : vector<128x128xf32>
    %3 = tpu.matmul %1, %2, %cst {dimension_numbers = #tpu.dot_dimension_numbers<[1], [0], [0], [1], [0, 0, 1, 1], [], []>} : vector<128x64xbf16>, vector<64x128xbf16>, vector<128x128xf32> -> vector<128x128xf32>
    %c0_3 = arith.constant 0 : index
    %c0_4 = arith.constant 0 : index
    %4 = vector.load %arg3[%c0_3, %c0_4] : memref<1x128xf32, #tpu.memory_space<vmem>>, vector<1x128xf32>
    %5 = vector.broadcast %4 : vector<1x128xf32> to vector<128x128xf32>
    %6 = arith.addf %3, %5 : vector<128x128xf32>
    %c0_5 = arith.constant 0 : index
    %c0_6 = arith.constant 0 : index
    %7 = vector.load %arg4[%c0_5, %c0_6] : memref<1x128xf32, #tpu.memory_space<vmem>>, vector<1x128xf32>
    %c0_7 = arith.constant 0 : index
    %c0_8 = arith.constant 0 : index
    %8 = vector.load %arg5[%c0_7, %c0_8] : memref<1x128xf32, #tpu.memory_space<vmem>>, vector<1x128xf32>
    %cst_9 = arith.constant dense<0.000000e+00> : vector<128xf32>
    %9 = vector.multi_reduction <add>, %6, %cst_9 [1] : vector<128x128xf32> to vector<128xf32>
    %10 = vector.shape_cast %9 : vector<128xf32> to vector<128x1xf32>
    %cst_10 = arith.constant 7.812500e-03 : f32
    %11 = vector.broadcast %cst_10 : f32 to vector<128x1xf32>
    %12 = arith.mulf %10, %11 : vector<128x1xf32>
    %13 = arith.mulf %6, %6 : vector<128x128xf32>
    %cst_11 = arith.constant dense<0.000000e+00> : vector<128xf32>
    %14 = vector.multi_reduction <add>, %13, %cst_11 [1] : vector<128x128xf32> to vector<128xf32>
    %15 = vector.shape_cast %14 : vector<128xf32> to vector<128x1xf32>
    %cst_12 = arith.constant 7.812500e-03 : f32
    %16 = vector.broadcast %cst_12 : f32 to vector<128x1xf32>
    %17 = arith.mulf %15, %16 : vector<128x1xf32>
    %18 = arith.mulf %12, %12 : vector<128x1xf32>
    %19 = arith.subf %17, %18 : vector<128x1xf32>
    %cst_13 = arith.constant 9.99999974E-6 : f32
    %20 = vector.broadcast %cst_13 : f32 to vector<128x1xf32>
    %21 = arith.addf %19, %20 : vector<128x1xf32>
    %22 = math.rsqrt %21 : vector<128x1xf32>
    %23 = vector.broadcast %12 : vector<128x1xf32> to vector<128x128xf32>
    %24 = arith.subf %6, %23 : vector<128x128xf32>
    %25 = vector.broadcast %22 : vector<128x1xf32> to vector<128x128xf32>
    %26 = arith.mulf %24, %25 : vector<128x128xf32>
    %27 = vector.broadcast %7 : vector<1x128xf32> to vector<128x128xf32>
    %28 = arith.mulf %26, %27 : vector<128x128xf32>
    %29 = vector.broadcast %8 : vector<1x128xf32> to vector<128x128xf32>
    %30 = arith.addf %28, %29 : vector<128x128xf32>
    %c0_14 = arith.constant 0 : index
    %31 = memref.load %arg12[%c0_14] : memref<2xf32, #tpu.memory_space<smem>>
    %cst_15 = arith.constant 0.000000e+00 : f32
    %32 = vector.broadcast %cst_15 : f32 to vector<128x128xf32>
    %33 = arith.cmpf oge, %30, %32 : vector<128x128xf32>
    %34 = vector.broadcast %31 : f32 to vector<128x128xf32>
    %35 = arith.mulf %34, %30 : vector<128x128xf32>
    %36 = arith.select %33, %30, %35 : vector<128x128xi1>, vector<128x128xf32>
    %37 = arith.truncf %36 : vector<128x128xf32> to vector<128x128xbf16>
    %c0_16 = arith.constant 0 : index
    %c0_17 = arith.constant 0 : index
    %38 = vector.load %arg6[%c0_16, %c0_17] : memref<128x128xbf16, #tpu.memory_space<vmem>>, vector<128x128xbf16>
    %cst_18 = arith.constant dense<0.000000e+00> : vector<128x128xf32>
    %39 = tpu.matmul %37, %38, %cst_18 {dimension_numbers = #tpu.dot_dimension_numbers<[1], [0], [0], [1], [0, 0, 1, 1], [], []>} : vector<128x128xbf16>, vector<128x128xbf16>, vector<128x128xf32> -> vector<128x128xf32>
    %c0_19 = arith.constant 0 : index
    %c0_20 = arith.constant 0 : index
    %40 = vector.load %arg7[%c0_19, %c0_20] : memref<1x128xf32, #tpu.memory_space<vmem>>, vector<1x128xf32>
    %41 = vector.broadcast %40 : vector<1x128xf32> to vector<128x128xf32>
    %42 = arith.addf %39, %41 : vector<128x128xf32>
    %c0_21 = arith.constant 0 : index
    %c0_22 = arith.constant 0 : index
    %43 = vector.load %arg8[%c0_21, %c0_22] : memref<1x128xf32, #tpu.memory_space<vmem>>, vector<1x128xf32>
    %c0_23 = arith.constant 0 : index
    %c0_24 = arith.constant 0 : index
    %44 = vector.load %arg9[%c0_23, %c0_24] : memref<1x128xf32, #tpu.memory_space<vmem>>, vector<1x128xf32>
    %cst_25 = arith.constant dense<0.000000e+00> : vector<128xf32>
    %45 = vector.multi_reduction <add>, %42, %cst_25 [1] : vector<128x128xf32> to vector<128xf32>
    %46 = vector.shape_cast %45 : vector<128xf32> to vector<128x1xf32>
    %cst_26 = arith.constant 7.812500e-03 : f32
    %47 = vector.broadcast %cst_26 : f32 to vector<128x1xf32>
    %48 = arith.mulf %46, %47 : vector<128x1xf32>
    %49 = arith.mulf %42, %42 : vector<128x128xf32>
    %cst_27 = arith.constant dense<0.000000e+00> : vector<128xf32>
    %50 = vector.multi_reduction <add>, %49, %cst_27 [1] : vector<128x128xf32> to vector<128xf32>
    %51 = vector.shape_cast %50 : vector<128xf32> to vector<128x1xf32>
    %cst_28 = arith.constant 7.812500e-03 : f32
    %52 = vector.broadcast %cst_28 : f32 to vector<128x1xf32>
    %53 = arith.mulf %51, %52 : vector<128x1xf32>
    %54 = arith.mulf %48, %48 : vector<128x1xf32>
    %55 = arith.subf %53, %54 : vector<128x1xf32>
    %cst_29 = arith.constant 9.99999974E-6 : f32
    %56 = vector.broadcast %cst_29 : f32 to vector<128x1xf32>
    %57 = arith.addf %55, %56 : vector<128x1xf32>
    %58 = math.rsqrt %57 : vector<128x1xf32>
    %59 = vector.broadcast %48 : vector<128x1xf32> to vector<128x128xf32>
    %60 = arith.subf %42, %59 : vector<128x128xf32>
    %61 = vector.broadcast %58 : vector<128x1xf32> to vector<128x128xf32>
    %62 = arith.mulf %60, %61 : vector<128x128xf32>
    %63 = vector.broadcast %43 : vector<1x128xf32> to vector<128x128xf32>
    %64 = arith.mulf %62, %63 : vector<128x128xf32>
    %65 = vector.broadcast %44 : vector<1x128xf32> to vector<128x128xf32>
    %66 = arith.addf %64, %65 : vector<128x128xf32>
    %c1 = arith.constant 1 : index
    %67 = memref.load %arg12[%c1] : memref<2xf32, #tpu.memory_space<smem>>
    %cst_30 = arith.constant 0.000000e+00 : f32
    %68 = vector.broadcast %cst_30 : f32 to vector<128x128xf32>
    %69 = arith.cmpf oge, %66, %68 : vector<128x128xf32>
    %70 = vector.broadcast %67 : f32 to vector<128x128xf32>
    %71 = arith.mulf %70, %66 : vector<128x128xf32>
    %72 = arith.select %69, %66, %71 : vector<128x128xi1>, vector<128x128xf32>
    %73 = arith.addf %72, %36 : vector<128x128xf32>
    %74 = arith.truncf %73 : vector<128x128xf32> to vector<128x128xbf16>
    %c0_31 = arith.constant 0 : index
    %c0_32 = arith.constant 0 : index
    %75 = vector.load %arg10[%c0_31, %c0_32] : memref<128x128xbf16, #tpu.memory_space<vmem>>, vector<128x128xbf16>
    %cst_33 = arith.constant dense<0.000000e+00> : vector<128x128xf32>
    %76 = tpu.matmul %74, %75, %cst_33 {dimension_numbers = #tpu.dot_dimension_numbers<[1], [0], [0], [1], [0, 0, 1, 1], [], []>} : vector<128x128xbf16>, vector<128x128xbf16>, vector<128x128xf32> -> vector<128x128xf32>
    %c0_34 = arith.constant 0 : index
    %c0_35 = arith.constant 0 : index
    %77 = vector.load %arg11[%c0_34, %c0_35] : memref<1x128xf32, #tpu.memory_space<vmem>>, vector<1x128xf32>
    %78 = vector.broadcast %77 : vector<1x128xf32> to vector<128x128xf32>
    %79 = arith.addf %76, %78 : vector<128x128xf32>
    %80 = arith.mulf %79, %79 : vector<128x128xf32>
    %cst_36 = arith.constant dense<0.000000e+00> : vector<128xf32>
    %81 = vector.multi_reduction <add>, %80, %cst_36 [1] : vector<128x128xf32> to vector<128xf32>
    %82 = vector.shape_cast %81 : vector<128xf32> to vector<128x1xf32>
    %cst_37 = arith.constant 1.000000e-24 : f32
    %83 = vector.broadcast %cst_37 : f32 to vector<128x1xf32>
    %84 = arith.maximumf %82, %83 : vector<128x1xf32>
    %85 = math.rsqrt %84 : vector<128x1xf32>
    %86 = vector.broadcast %85 : vector<128x1xf32> to vector<128x128xf32>
    %87 = arith.mulf %79, %86 : vector<128x128xf32>
    %c0_38 = arith.constant 0 : index
    %c0_39 = arith.constant 0 : index
    %88 = vector.load %arg13[%c0_38, %c0_39] : memref<128x128xf32, #tpu.memory_space<vmem>>, vector<128x128xf32>
    tpu.vector_store %arg13[%c0_38, %c0_39], %87 {strides = array<i32>} : memref<128x128xf32, #tpu.memory_space<vmem>>, vector<128x128xf32>,
    return
  }
  func.func @transform_0(%arg0: i32) -> (i32, i32) {
    %c0_i32 = arith.constant 0 : i32
    %c0_i32_0 = arith.constant 0 : i32
    return %arg0, %c0_i32 : i32, i32
  }
  func.func @transform_1(%arg0: i32) -> (i32, i32) {
    %c0_i32 = arith.constant 0 : i32
    %c0_i32_0 = arith.constant 0 : i32
    %c0_i32_1 = arith.constant 0 : i32
    return %c0_i32, %c0_i32_0 : i32, i32
  }
  func.func @transform_2(%arg0: i32) -> (i32, i32) {
    %c0_i32 = arith.constant 0 : i32
    %c0_i32_0 = arith.constant 0 : i32
    %c0_i32_1 = arith.constant 0 : i32
    return %c0_i32, %c0_i32_0 : i32, i32
  }
  func.func @transform_3(%arg0: i32) -> (i32, i32) {
    %c0_i32 = arith.constant 0 : i32
    %c0_i32_0 = arith.constant 0 : i32
    %c0_i32_1 = arith.constant 0 : i32
    return %c0_i32, %c0_i32_0 : i32, i32
  }
  func.func @transform_4(%arg0: i32) -> (i32, i32) {
    %c0_i32 = arith.constant 0 : i32
    %c0_i32_0 = arith.constant 0 : i32
    %c0_i32_1 = arith.constant 0 : i32
    return %c0_i32, %c0_i32_0 : i32, i32
  }
  func.func @transform_5(%arg0: i32) -> (i32, i32) {
    %c0_i32 = arith.constant 0 : i32
    %c0_i32_0 = arith.constant 0 : i32
    %c0_i32_1 = arith.constant 0 : i32
    return %c0_i32, %c0_i32_0 : i32, i32
  }
  func.func @transform_6(%arg0: i32) -> (i32, i32) {
    %c0_i32 = arith.constant 0 : i32
    %c0_i32_0 = arith.constant 0 : i32
    %c0_i32_1 = arith.constant 0 : i32
    return %c0_i32, %c0_i32_0 : i32, i32
  }
  func.func @transform_7(%arg0: i32) -> (i32, i32) {
    %c0_i32 = arith.constant 0 : i32
    %c0_i32_0 = arith.constant 0 : i32
    %c0_i32_1 = arith.constant 0 : i32
    return %c0_i32, %c0_i32_0 : i32, i32
  }
  func.func @transform_8(%arg0: i32) -> (i32, i32) {
    %c0_i32 = arith.constant 0 : i32
    %c0_i32_0 = arith.constant 0 : i32
    %c0_i32_1 = arith.constant 0 : i32
    return %c0_i32, %c0_i32_0 : i32, i32
  }
  func.func @transform_9(%arg0: i32) -> (i32, i32) {
    %c0_i32 = arith.constant 0 : i32
    %c0_i32_0 = arith.constant 0 : i32
    %c0_i32_1 = arith.constant 0 : i32
    return %c0_i32, %c0_i32_0 : i32, i32
  }
  func.func @transform_10(%arg0: i32) -> (i32, i32) {
    %c0_i32 = arith.constant 0 : i32
    %c0_i32_0 = arith.constant 0 : i32
    %c0_i32_1 = arith.constant 0 : i32
    return %c0_i32, %c0_i32_0 : i32, i32
  }
  func.func @transform_11(%arg0: i32) -> i32 {
    %c0_i32 = arith.constant 0 : i32
    %c0_i32_0 = arith.constant 0 : i32
    return %c0_i32 : i32
  }
  func.func @transform_12(%arg0: i32) -> (i32, i32) {
    %c0_i32 = arith.constant 0 : i32
    %c0_i32_0 = arith.constant 0 : i32
    return %arg0, %c0_i32 : i32, i32
  }
}

</mosaic_0001>

<llo_original>
// kernel: encoder_cfg_forward.1
$region0: #{encoder_cfg_forward.1}
  #allocation0 [shape = 'u32[]', space=smem, size = 0x4, offset = 0x4, fixed_abs, tag = 'smem constant byte address 0x4 - core index']
  #allocation1 [shape = 'u32[144,128]{1,0:T(1,128)}', space=vmem, size = 0x12000, scoped, tag = 'internal scratch']
  %s0 = inlined_call_operand.vmem [shape: f32[256,64], index: 0, kind: input, shape index: {}]
  %s1 = inlined_call_operand.vmem [shape: bf16[64,128], index: 1, kind: input, shape index: {}]
  %s2 = inlined_call_operand.vmem [shape: f32[1,128], index: 2, kind: input, shape index: {}]
  %s3 = inlined_call_operand.vmem [shape: f32[1,128], index: 3, kind: input, shape index: {}]
  %s4 = inlined_call_operand.vmem [shape: f32[1,128], index: 4, kind: input, shape index: {}]
  %s5 = inlined_call_operand.vmem [shape: bf16[128,128], index: 5, kind: input, shape index: {}]
  %s6 = inlined_call_operand.vmem [shape: f32[1,128], index: 6, kind: input, shape index: {}]
  %s7 = inlined_call_operand.vmem [shape: f32[1,128], index: 7, kind: input, shape index: {}]
  %s8 = inlined_call_operand.vmem [shape: f32[1,128], index: 8, kind: input, shape index: {}]
  %s9 = inlined_call_operand.vmem [shape: bf16[128,128], index: 9, kind: input, shape index: {}]
  %s10 = inlined_call_operand.vmem [shape: f32[1,128], index: 10, kind: input, shape index: {}]
  %s11 = inlined_call_operand.vmem [shape: f32[2], index: 11, kind: input, shape index: {}]
  %s12 = inlined_call_operand.hbm [shape: f32[256,128], index: 12, kind: output, shape index: {}]
  %s13 = sld [smem:[#allocation0]]
  $region85: #{encoder_cfg_forward.1} parent=0
    _
  %s15 = ssub.s32 1, %s13
  %s16 = scalar_select 0, %s15, %s13
  $region1: #{encoder_cfg_forward.1} parent=0
    #allocation2 [shape = 'u8[512]{0}', space=smem, size = 0x200, scoped, tag = 'input window, operand 11, single buffered']
    #allocation3 [shape = 's32[2]{0}', space=sflag, size = 0x8, scoped, tag = 'scoped memory for encoder_cfg_forward.1']
    #allocation4 [shape = 's32[2]{0}', space=sflag, size = 0x8, scoped, tag = 'scoped memory for encoder_cfg_forward.1']
    #allocation5 [shape = 'u8[131072]{0}', space=vmem, size = 0x20000, scoped, tag = 'output window, operand 0']
    %17 = vsyncpa [#allocation4], 0
    %18 = vsyncpa [#allocation3], 0
    %s19 = scalar_lea.sflag [#allocation3], 1
    %20 = vsyncpa %s19, 0
    loop: start=0, step=1, limit=4
    $region2: #{encoder_cfg_forward.1} parent=1 // loop_pre_header
      _
    $region3: #{encoder_cfg_forward.1} parent=1 // loop_header
      %s22 = sphi 0, %s26
      %p23 = scmp.ge.s32.totalorder %s22, 4
      %s32 = sphi 0, %s34
      %s35 = sphi 0, %s32
      %s36 = sphi 0, %s35
      %s52 = sphi 0, %s36
      %s56 = sphi 0, %s56
      %s58 = sphi 0, %s56
      %s59 = sphi 0, %s58
      %s73 = sphi 0, %s59
      %s77 = sphi 0, %s77
      %s79 = sphi 0, %s77
      %s80 = sphi 0, %s79
      %s94 = sphi 0, %s80
      %s98 = sphi 0, %s98
      %s100 = sphi 0, %s98
      %s101 = sphi 0, %s100
      %s115 = sphi 0, %s101
      %s119 = sphi 0, %s119
      %s121 = sphi 0, %s119
      %s122 = sphi 0, %s121
      %s136 = sphi 0, %s122
      %s140 = sphi 0, %s140
      %s142 = sphi 0, %s140
      %s143 = sphi 0, %s142
      %s157 = sphi 0, %s143
      %s161 = sphi 0, %s161
      %s163 = sphi 0, %s161
      %s164 = sphi 0, %s163
      %s178 = sphi 0, %s164
      %s182 = sphi 0, %s182
      %s184 = sphi 0, %s182
      %s185 = sphi 0, %s184
      %s199 = sphi 0, %s185
      %s203 = sphi 0, %s203
      %s205 = sphi 0, %s203
      %s206 = sphi 0, %s205
      %s220 = sphi 0, %s206
      %s224 = sphi 0, %s224
      %s226 = sphi 0, %s224
      %s227 = sphi 0, %s226
      %s241 = sphi 0, %s227
      %s245 = sphi 0, %s245
      %s247 = sphi 0, %s245
      %s248 = sphi 0, %s247
      %s262 = sphi 0, %s248
      %s266 = sphi 0, %s266
      %s268 = sphi 0, %s266
      %s269 = sphi 0, %s268
      %s283 = sphi 0, %s269
      %s289 = sphi 0, %s291
      %s292 = sphi 0, %s289
      %s293 = sphi 0, %s292
      %s309 = sphi 0, %s293
    $region4: #{encoder_cfg_forward.1} parent=1 // loop_header_branch
      %25 = sbr.rel (%p23) target = $region8
    $region5: #{encoder_cfg_forward.1} parent=1 // loop_body
      %s27 = ssub.s32 %s22, 1
      %s28 = ssub.s32 %s22, 2
      %s29 = sadd.s32 %s22, 1
      %s30 = ssub.s32 %s22, %s29
      %p31 = scmp.eq.s32.totalorder %s30, 0
      %s33 = sadd.s32 %s32, 1
      %s34 = scalar_select %p31, %s32, %s33
      %p37 = pneg %p31
      %p38 = scmp.eq.s32.totalorder %s22, 1
      %p39 = por %p37, %p38
      %p40 = scmp.ne.s32.totalorder %s32, %s35
      %p41 = scmp.eq.s32.totalorder %s22, 0
      %p42 = por %p40, %p41
      %p43 = scmp.ne.s32.totalorder %s32, %s35
      %p44 = scmp.eq.s32.totalorder %s27, 1
      %p45 = por %p43, %p44
      %p46 = scmp.ne.s32.totalorder %s35, %s36
      %p47 = scmp.eq.s32.totalorder %s27, 0
      %p48 = por %p46, %p47
      %p49 = scmp.ne.s32.totalorder %s35, %s36
      %p50 = scmp.eq.s32.totalorder %s28, 1
      %p51 = por %p49, %p50
      %p53 = scmp.ne.s32.totalorder %s36, %s52
      %p54 = scmp.eq.s32.totalorder %s28, 0
      %p55 = por %p53, %p54
      %s57 = sadd.s32 %s56, 1
      %p60 = scmp.eq.s32.totalorder %s22, 1
      %p61 = scmp.ne.s32.totalorder %s56, %s58
      %p62 = scmp.eq.s32.totalorder %s22, 0
      %p63 = por %p61, %p62
      %p64 = scmp.ne.s32.totalorder %s56, %s58
      %p65 = scmp.eq.s32.totalorder %s27, 1
      %p66 = por %p64, %p65
      %p67 = scmp.ne.s32.totalorder %s58, %s59
      %p68 = scmp.eq.s32.totalorder %s27, 0
      %p69 = por %p67, %p68
      %p70 = scmp.ne.s32.totalorder %s58, %s59
      %p71 = scmp.eq.s32.totalorder %s28, 1
      %p72 = por %p70, %p71
      %p74 = scmp.ne.s32.totalorder %s59, %s73
      %p75 = scmp.eq.s32.totalorder %s28, 0
      %p76 = por %p74, %p75
      %s78 = sadd.s32 %s77, 1
      %p81 = scmp.eq.s32.totalorder %s22, 1
      %p82 = scmp.ne.s32.totalorder %s77, %s79
      %p83 = scmp.eq.s32.totalorder %s22, 0
      %p84 = por %p82, %p83
      %p85 = scmp.ne.s32.totalorder %s77, %s79
      %p86 = scmp.eq.s32.totalorder %s27, 1
      %p87 = por %p85, %p86
      %p88 = scmp.ne.s32.totalorder %s79, %s80
      %p89 = scmp.eq.s32.totalorder %s27, 0
      %p90 = por %p88, %p89
      %p91 = scmp.ne.s32.totalorder %s79, %s80
      %p92 = scmp.eq.s32.totalorder %s28, 1
      %p93 = por %p91, %p92
      %p95 = scmp.ne.s32.totalorder %s80, %s94
      %p96 = scmp.eq.s32.totalorder %s28, 0
      %p97 = por %p95, %p96
      %s99 = sadd.s32 %s98, 1
      %p102 = scmp.eq.s32.totalorder %s22, 1
      %p103 = scmp.ne.s32.totalorder %s98, %s100
      %p104 = scmp.eq.s32.totalorder %s22, 0
      %p105 = por %p103, %p104
      %p106 = scmp.ne.s32.totalorder %s98, %s100
      %p107 = scmp.eq.s32.totalorder %s27, 1
      %p108 = por %p106, %p107
      %p109 = scmp.ne.s32.totalorder %s100, %s101
      %p110 = scmp.eq.s32.totalorder %s27, 0
      %p111 = por %p109, %p110
      %p112 = scmp.ne.s32.totalorder %s100, %s101
      %p113 = scmp.eq.s32.totalorder %s28, 1
      %p114 = por %p112, %p113
      %p116 = scmp.ne.s32.totalorder %s101, %s115
      %p117 = scmp.eq.s32.totalorder %s28, 0
      %p118 = por %p116, %p117
      %s120 = sadd.s32 %s119, 1
      %p123 = scmp.eq.s32.totalorder %s22, 1
      %p124 = scmp.ne.s32.totalorder %s119, %s121
      %p125 = scmp.eq.s32.totalorder %s22, 0
      %p126 = por %p124, %p125
      %p127 = scmp.ne.s32.totalorder %s119, %s121
      %p128 = scmp.eq.s32.totalorder %s27, 1
      %p129 = por %p127, %p128
      %p130 = scmp.ne.s32.totalorder %s121, %s122
      %p131 = scmp.eq.s32.totalorder %s27, 0
      %p132 = por %p130, %p131
      %p133 = scmp.ne.s32.totalorder %s121, %s122
      %p134 = scmp.eq.s32.totalorder %s28, 1
      %p135 = por %p133, %p134
      %p137 = scmp.ne.s32.totalorder %s122, %s136
      %p138 = scmp.eq.s32.totalorder %s28, 0
      %p139 = por %p137, %p138
      %s141 = sadd.s32 %s140, 1
      %p144 = scmp.eq.s32.totalorder %s22, 1
      %p145 = scmp.ne.s32.totalorder %s140, %s142
      %p146 = scmp.eq.s32.totalorder %s22, 0
      %p147 = por %p145, %p146
      %p148 = scmp.ne.s32.totalorder %s140, %s142
      %p149 = scmp.eq.s32.totalorder %s27, 1
      %p150 = por %p148, %p149
      %p151 = scmp.ne.s32.totalorder %s142, %s143
      %p152 = scmp.eq.s32.totalorder %s27, 0
      %p153 = por %p151, %p152
      %p154 = scmp.ne.s32.totalorder %s142, %s143
      %p155 = scmp.eq.s32.totalorder %s28, 1
      %p156 = por %p154, %p155
      %p158 = scmp.ne.s32.totalorder %s143, %s157
      %p159 = scmp.eq.s32.totalorder %s28, 0
      %p160 = por %p158, %p159
      %s162 = sadd.s32 %s161, 1
      %p165 = scmp.eq.s32.totalorder %s22, 1
      %p166 = scmp.ne.s32.totalorder %s161, %s163
      %p167 = scmp.eq.s32.totalorder %s22, 0
      %p168 = por %p166, %p167
      %p169 = scmp.ne.s32.totalorder %s161, %s163
      %p170 = scmp.eq.s32.totalorder %s27, 1
      %p171 = por %p169, %p170
      %p172 = scmp.ne.s32.totalorder %s163, %s164
      %p173 = scmp.eq.s32.totalorder %s27, 0
      %p174 = por %p172, %p173
      %p175 = scmp.ne.s32.totalorder %s163, %s164
      %p176 = scmp.eq.s32.totalorder %s28, 1
      %p177 = por %p175, %p176
      %p179 = scmp.ne.s32.totalorder %s164, %s178
      %p180 = scmp.eq.s32.totalorder %s28, 0
      %p181 = por %p179, %p180
      %s183 = sadd.s32 %s182, 1
      %p186 = scmp.eq.s32.totalorder %s22, 1
      %p187 = scmp.ne.s32.totalorder %s182, %s184
      %p188 = scmp.eq.s32.totalorder %s22, 0
      %p189 = por %p187, %p188
      %p190 = scmp.ne.s32.totalorder %s182, %s184
      %p191 = scmp.eq.s32.totalorder %s27, 1
      %p192 = por %p190, %p191
      %p193 = scmp.ne.s32.totalorder %s184, %s185
      %p194 = scmp.eq.s32.totalorder %s27, 0
      %p195 = por %p193, %p194
      %p196 = scmp.ne.s32.totalorder %s184, %s185
      %p197 = scmp.eq.s32.totalorder %s28, 1
      %p198 = por %p196, %p197
      %p200 = scmp.ne.s32.totalorder %s185, %s199
      %p201 = scmp.eq.s32.totalorder %s28, 0
      %p202 = por %p200, %p201
      %s204 = sadd.s32 %s203, 1
      %p207 = scmp.eq.s32.totalorder %s22, 1
      %p208 = scmp.ne.s32.totalorder %s203, %s205
      %p209 = scmp.eq.s32.totalorder %s22, 0
      %p210 = por %p208, %p209
      %p211 = scmp.ne.s32.totalorder %s203, %s205
      %p212 = scmp.eq.s32.totalorder %s27, 1
      %p213 = por %p211, %p212
      %p214 = scmp.ne.s32.totalorder %s205, %s206
      %p215 = scmp.eq.s32.totalorder %s27, 0
      %p216 = por %p214, %p215
      %p217 = scmp.ne.s32.totalorder %s205, %s206
      %p218 = scmp.eq.s32.totalorder %s28, 1
      %p219 = por %p217, %p218
      %p221 = scmp.ne.s32.totalorder %s206, %s220
      %p222 = scmp.eq.s32.totalorder %s28, 0
      %p223 = por %p221, %p222
      %s225 = sadd.s32 %s224, 1
      %p228 = scmp.eq.s32.totalorder %s22, 1
      %p229 = scmp.ne.s32.totalorder %s224, %s226
      %p230 = scmp.eq.s32.totalorder %s22, 0
      %p231 = por %p229, %p230
      %p232 = scmp.ne.s32.totalorder %s224, %s226
      %p233 = scmp.eq.s32.totalorder %s27, 1
      %p234 = por %p232, %p233
      %p235 = scmp.ne.s32.totalorder %s226, %s227
      %p236 = scmp.eq.s32.totalorder %s27, 0
      %p237 = por %p235, %p236
      %p238 = scmp.ne.s32.totalorder %s226, %s227
      %p239 = scmp.eq.s32.totalorder %s28, 1
      %p240 = por %p238, %p239
      %p242 = scmp.ne.s32.totalorder %s227, %s241
      %p243 = scmp.eq.s32.totalorder %s28, 0
      %p244 = por %p242, %p243
      %s246 = sadd.s32 %s245, 1
      %p249 = scmp.eq.s32.totalorder %s22, 1
      %p250 = scmp.ne.s32.totalorder %s245, %s247
      %p251 = scmp.eq.s32.totalorder %s22, 0
      %p252 = por %p250, %p251
      %p253 = scmp.ne.s32.totalorder %s245, %s247
      %p254 = scmp.eq.s32.totalorder %s27, 1
      %p255 = por %p253, %p254
      %p256 = scmp.ne.s32.totalorder %s247, %s248
      %p257 = scmp.eq.s32.totalorder %s27, 0
      %p258 = por %p256, %p257
      %p259 = scmp.ne.s32.totalorder %s247, %s248
      %p260 = scmp.eq.s32.totalorder %s28, 1
      %p261 = por %p259, %p260
      %p263 = scmp.ne.s32.totalorder %s248, %s262
      %p264 = scmp.eq.s32.totalorder %s28, 0
      %p265 = por %p263, %p264
      %s267 = sadd.s32 %s266, 1
      %p270 = scmp.eq.s32.totalorder %s22, 1
      %p271 = scmp.ne.s32.totalorder %s266, %s268
      %p272 = scmp.eq.s32.totalorder %s22, 0
      %p273 = por %p271, %p272
      %p274 = scmp.ne.s32.totalorder %s266, %s268
      %p275 = scmp.eq.s32.totalorder %s27, 1
      %p276 = por %p274, %p275
      %p277 = scmp.ne.s32.totalorder %s268, %s269
      %p278 = scmp.eq.s32.totalorder %s27, 0
      %p279 = por %p277, %p278
      %p280 = scmp.ne.s32.totalorder %s268, %s269
      %p281 = scmp.eq.s32.totalorder %s28, 1
      %p282 = por %p280, %p281
      %p284 = scmp.ne.s32.totalorder %s269, %s283
      %p285 = scmp.eq.s32.totalorder %s28, 0
      %p286 = por %p284, %p285
      %s287 = ssub.s32 %s22, %s29
      %p288 = scmp.eq.s32.totalorder %s287, 0
      %s290 = sadd.s32 %s289, 1
      %s291 = scalar_select %p288, %s289, %s290
      %p294 = pneg %p288
      %p295 = scmp.eq.s32.totalorder %s22, 1
      %p296 = por %p294, %p295
      %p297 = scmp.ne.s32.totalorder %s289, %s292
      %p298 = scmp.eq.s32.totalorder %s22, 0
      %p299 = por %p297, %p298
      %p300 = scmp.ne.s32.totalorder %s289, %s292
      %p301 = scmp.eq.s32.totalorder %s27, 1
      %p302 = por %p300, %p301
      %p303 = scmp.ne.s32.totalorder %s292, %s293
      %p304 = scmp.eq.s32.totalorder %s27, 0
      %p305 = por %p303, %p304
      %p306 = scmp.ne.s32.totalorder %s292, %s293
      %p307 = scmp.eq.s32.totalorder %s28, 1
      %p308 = por %p306, %p307
      %p310 = scmp.ne.s32.totalorder %s293, %s309
      %p311 = scmp.eq.s32.totalorder %s28, 0
      %p312 = por %p310, %p311
      %p313 = scmp.le.s32.totalorder 1, %s22
      %p314 = scmp.lt.s32.totalorder %s22, 3
      %p315 = pnand %p313, %p314
      %p316 = pneg %p315
      // Predicated region
      $region9: #{encoder_cfg_forward.1} parent=5 // pred_check
        _
      $region10: #{encoder_cfg_forward.1} parent=5 // pred_check_branch
        %318 = sbr.rel (%p315) target = $region12
      $region11: #{encoder_cfg_forward.1} parent=5 // pred_region
        %s319 = ssub.s32 %s22, 1
        // Predicated region
        $region13: #{encoder_cfg_forward.1} parent=11 // pred_check
          %p320 = pneg %p69
        $region14: #{encoder_cfg_forward.1} parent=11 // pred_check_branch
          %322 = sbr.rel (%p320) target = $region16
        $region15: #{encoder_cfg_forward.1} parent=11 // pred_region
          _
        $region16: #{encoder_cfg_forward.1} parent=11 // pred_fallthru
          _
        // Predicated region
        $region17: #{encoder_cfg_forward.1} parent=11 // pred_check
          %p323 = pneg %p90
        $region18: #{encoder_cfg_forward.1} parent=11 // pred_check_branch
          %325 = sbr.rel (%p323) target = $region20
        $region19: #{encoder_cfg_forward.1} parent=11 // pred_region
          _
        $region20: #{encoder_cfg_forward.1} parent=11 // pred_fallthru
          _
        // Predicated region
        $region21: #{encoder_cfg_forward.1} parent=11 // pred_check
          %p326 = pneg %p111
        $region22: #{encoder_cfg_forward.1} parent=11 // pred_check_branch
          %328 = sbr.rel (%p326) target = $region24
        $region23: #{encoder_cfg_forward.1} parent=11 // pred_region
          _
        $region24: #{encoder_cfg_forward.1} parent=11 // pred_fallthru
          _
        // Predicated region
        $region25: #{encoder_cfg_forward.1} parent=11 // pred_check
          %p329 = pneg %p132
        $region26: #{encoder_cfg_forward.1} parent=11 // pred_check_branch
          %331 = sbr.rel (%p329) target = $region28
        $region27: #{encoder_cfg_forward.1} parent=11 // pred_region
          _
        $region28: #{encoder_cfg_forward.1} parent=11 // pred_fallthru
          _
        // Predicated region
        $region29: #{encoder_cfg_forward.1} parent=11 // pred_check
          %p332 = pneg %p153
        $region30: #{encoder_cfg_forward.1} parent=11 // pred_check_branch
          %334 = sbr.rel (%p332) target = $region32
        $region31: #{encoder_cfg_forward.1} parent=11 // pred_region
          _
        $region32: #{encoder_cfg_forward.1} parent=11 // pred_fallthru
          _
        // Predicated region
        $region33: #{encoder_cfg_forward.1} parent=11 // pred_check
          %p335 = pneg %p174
        $region34: #{encoder_cfg_forward.1} parent=11 // pred_check_branch
          %337 = sbr.rel (%p335) target = $region36
        $region35: #{encoder_cfg_forward.1} parent=11 // pred_region
          _
        $region36: #{encoder_cfg_forward.1} parent=11 // pred_fallthru
          _
        // Predicated region
        $region37: #{encoder_cfg_forward.1} parent=11 // pred_check
          %p338 = pneg %p195
        $region38: #{encoder_cfg_forward.1} parent=11 // pred_check_branch
          %340 = sbr.rel (%p338) target = $region40
        $region39: #{encoder_cfg_forward.1} parent=11 // pred_region
          _
        $region40: #{encoder_cfg_forward.1} parent=11 // pred_fallthru
          _
        // Predicated region
        $region41: #{encoder_cfg_forward.1} parent=11 // pred_check
          %p341 = pneg %p216
        $region42: #{encoder_cfg_forward.1} parent=11 // pred_check_branch
          %343 = sbr.rel (%p341) target = $region44
        $region43: #{encoder_cfg_forward.1} parent=11 // pred_region
          _
        $region44: #{encoder_cfg_forward.1} parent=11 // pred_fallthru
          _
        // Predicated region
        $region45: #{encoder_cfg_forward.1} parent=11 // pred_check
          %p344 = pneg %p237
        $region46: #{encoder_cfg_forward.1} parent=11 // pred_check_branch
          %346 = sbr.rel (%p344) target = $region48
        $region47: #{encoder_cfg_forward.1} parent=11 // pred_region
          _
        $region48: #{encoder_cfg_forward.1} parent=11 // pred_fallthru
          _
        // Predicated region
        $region49: #{encoder_cfg_forward.1} parent=11 // pred_check
          %p347 = pneg %p258
        $region50: #{encoder_cfg_forward.1} parent=11 // pred_check_branch
          %349 = sbr.rel (%p347) target = $region52
        $region51: #{encoder_cfg_forward.1} parent=11 // pred_region
          _
        $region52: #{encoder_cfg_forward.1} parent=11 // pred_fallthru
          _
        // Predicated region
        $region53: #{encoder_cfg_forward.1} parent=11 // pred_check
          %p350 = pneg %p279
        $region54: #{encoder_cfg_forward.1} parent=11 // pred_check_branch
          %352 = sbr.rel (%p350) target = $region56
        $region55: #{encoder_cfg_forward.1} parent=11 // pred_region
          %s354 = ssub.s32 16, 16
          %355 = vsyncadd [#allocation4], %s354
          %s357 = sshll.u32 %s11, 4
          %s358 = int_to_ptr.vmem [resolvable:$true] %s357
          %360 = dma.vmem_to_smem %s358, 16, [#allocation2], [#allocation4]
        $region56: #{encoder_cfg_forward.1} parent=11 // pred_fallthru
          _
      $region12: #{encoder_cfg_forward.1} parent=5 // pred_fallthru
        _
      %p361 = scmp.lt.s32.totalorder %s22, 2
      // Predicated region
      $region57: #{encoder_cfg_forward.1} parent=5 // pred_check
        %p362 = pneg %p361
      $region58: #{encoder_cfg_forward.1} parent=5 // pred_check_branch
        %364 = sbr.rel (%p362) target = $region60
      $region59: #{encoder_cfg_forward.1} parent=5 // pred_region
        // Predicated region
        $region61: #{encoder_cfg_forward.1} parent=59 // pred_check
          %p365 = pneg %p42
        $region62: #{encoder_cfg_forward.1} parent=59 // pred_check_branch
          %367 = sbr.rel (%p365) target = $region64
        $region63: #{encoder_cfg_forward.1} parent=59 // pred_region
          %s368 = smul.u32 16, %s22
          %p369 = scmp.lt.s32.totalorder %s368, 31
          %s370 = scalar_select %p369, %s368, 31
          %s371 = smul.addr %s370, 8
          %s372 = scalar_lea.vmem %s0, %s371
          %s373 = smul.u32 16, %s22
        $region64: #{encoder_cfg_forward.1} parent=59 // pred_fallthru
          _
      $region60: #{encoder_cfg_forward.1} parent=5 // pred_fallthru
        _
      %p374 = scmp.le.s32.totalorder 1, %s22
      %p375 = scmp.lt.s32.totalorder %s22, 3
      %p376 = pnand %p374, %p375
      %p377 = pneg %p376
      // Predicated region
      $region65: #{encoder_cfg_forward.1} parent=5 // pred_check
        _
      $region66: #{encoder_cfg_forward.1} parent=5 // pred_check_branch
        %379 = sbr.rel (%p376) target = $region68
      $region67: #{encoder_cfg_forward.1} parent=5 // pred_region
        %s380 = ssub.s32 %s22, 1
        // Predicated region
        $region69: #{encoder_cfg_forward.1} parent=67 // pred_check
          %p381 = pneg %p279
        $region70: #{encoder_cfg_forward.1} parent=67 // pred_check_branch
          %383 = sbr.rel (%p381) target = $region72
        $region71: #{encoder_cfg_forward.1} parent=67 // pred_region
          %384 = dma.done [#allocation4], 16
        $region72: #{encoder_cfg_forward.1} parent=67 // pred_fallthru
          _
        %385 = sfence
        %s386 = smul.u32 16, %s27
        %p387 = scmp.lt.s32.totalorder %s386, 31
        %s388 = scalar_select %p387, %s386, 31
        %s389 = smul.addr %s388, 8
        %s390 = scalar_lea.vmem %s0, %s389
        %p391 = pneg %p48
        %p392 = pneg %p45
        %p393 = pneg %p69
        %p394 = pneg %p66
        %p395 = pneg %p90
        %p396 = pneg %p87
        %p397 = pneg %p111
        %p398 = pneg %p108
        %p399 = pneg %p132
        %p400 = pneg %p129
        %p401 = pneg %p153
        %p402 = pneg %p150
        %p403 = pneg %p174
        %p404 = pneg %p171
        %p405 = pneg %p195
        %p406 = pneg %p192
        %p407 = pneg %p216
        %p408 = pneg %p213
        %p409 = pneg %p237
        %p410 = pneg %p234
        %p411 = pneg %p258
        %p412 = pneg %p255
        %p413 = pneg %p279
        %p414 = pneg %p276
        %p415 = pneg %p305
        %p416 = pneg %p302
        %s417 = sand.u32 %s292, 1
        %s418 = scalar_lea.sflag [#allocation3], %s417
        %s419 = sand.u32 %s292, 1
        %s420 = smul.addr %s419, 128
        %s421 = scalar_lea.vmem [#allocation5], %s420
        %s422 = smul.u32 16, %s27
        %p423 = scmp.lt.s32.totalorder %s422, 31
        %s424 = scalar_select %p423, %s422, 31
        %s425 = smul.addr %s424, 8
        %s426 = scalar_lea.vmem %s0, %s425
        %s427 = smul.u32 16, %s27
        %s428 = smul.u32 16, %s27
        %v430 = vld [vmem:[%s426] sm:$0xff]
        %v431 = vld [vmem:[%s426 + $0x8] sm:$0xff]
        %v432 = vld [vmem:[%s426 + $0x10] sm:$0xff]
        %v433 = vld [vmem:[%s426 + $0x18] sm:$0xff]
        %v434 = vld [vmem:[%s426 + $0x20] sm:$0xff]
        %v435 = vld [vmem:[%s426 + $0x28] sm:$0xff]
        %v436 = vld [vmem:[%s426 + $0x30] sm:$0xff]
        %v437 = vld [vmem:[%s426 + $0x38] sm:$0xff]
        %v438 = vld [vmem:[%s426 + $0x40] sm:$0xff]
        %v439 = vld [vmem:[%s426 + $0x48] sm:$0xff]
        %v440 = vld [vmem:[%s426 + $0x50] sm:$0xff]
        %v441 = vld [vmem:[%s426 + $0x58] sm:$0xff]
        %v442 = vld [vmem:[%s426 + $0x60] sm:$0xff]
        %v443 = vld [vmem:[%s426 + $0x68] sm:$0xff]
        %v444 = vld [vmem:[%s426 + $0x70] sm:$0xff]
        %v445 = vld [vmem:[%s426 + $0x78] sm:$0xff]
        %v446 = vpack.c.bf16 %v431, %v430
        %v447 = vpack.c.bf16 %v433, %v432
        %v448 = vpack.c.bf16 %v435, %v434
        %v449 = vpack.c.bf16 %v437, %v436
        %v450 = vpack.c.bf16 %v439, %v438
        %v451 = vpack.c.bf16 %v441, %v440
        %v452 = vpack.c.bf16 %v443, %v442
        %v453 = vpack.c.bf16 %v445, %v444
        %v454 = vld [vmem:[%s1] sm:$0xf]
        %v455 = vld [vmem:[%s1 + $0x4] sm:$0xf]
        %v456 = vld [vmem:[%s1 + $0x8] sm:$0xf]
        %v457 = vld [vmem:[%s1 + $0xc] sm:$0xf]
        %v458 = vld [vmem:[%s1 + $0x10] sm:$0xf]
        %v459 = vld [vmem:[%s1 + $0x14] sm:$0xf]
        %v460 = vld [vmem:[%s1 + $0x18] sm:$0xf]
        %v461 = vld [vmem:[%s1 + $0x1c] sm:$0xf]
        %v462 = vld [vmem:[%s2] sm:$0x1]
        %v464 = vlaneseq
        %v465 = vshrl.u32 %v464, 7
        %v466 = vsub.s32 0, %v465
        %v467 = vrot.slane %v462, %v466
        %v477 = vunpack.c.l.b16 %v454
        %v478 = vunpack.c.l.b16 %v455
        %v479 = vunpack.c.l.b16 %v456
        %v480 = vunpack.c.l.b16 %v457
        %v481 = vunpack.c.l.b16 %v458
        %v482 = vunpack.c.l.b16 %v459
        %v483 = vunpack.c.l.b16 %v460
        %v484 = vunpack.c.l.b16 %v461
        %v485 = vpack.c.b16 %v478, %v477
        %v486 = vpack.c.b16 %v480, %v479
        %v487 = vpack.c.b16 %v482, %v481
        %v488 = vpack.c.b16 %v484, %v483
        %vm493 = vcmask 523264
        %v495 = vsel %vm493, %v446, 0
        %v498 = vsel %vm493, %v447, 0
        %v501 = vsel %vm493, %v448, 0
        %v504 = vsel %vm493, %v449, 0
        %v507 = vsel %vm493, %v450, 0
        %v510 = vsel %vm493, %v451, 0
        %v513 = vsel %vm493, %v452, 0
        %v516 = vsel %vm493, %v453, 0
        %518 = vmatprep.subr.bf16.mxu0 0
        %519 = vmatpush1.bf16.msra.mxu0 %v485
        %520 = vmatprep.subr.bf16.mxu0 0
        %521 = vmatpush1.bf16.msra.mxu0 %v486
        %522 = vmatprep.subr.bf16.mxu0 0
        %523 = vmatpush1.bf16.msra.mxu0 %v487
        %524 = vmatprep.subr.bf16.mxu0 0
        %525 = vmatpush1.bf16.msra.mxu0 %v488
        %526 = vmatprep.subr.bf16.mxu0 0
        %527 = vmatpush1.bf16.msra.mxu0 0
        %528 = vmatprep.subr.bf16.mxu0 0
        %529 = vmatpush1.bf16.msra.mxu0 0
        %530 = vmatprep.subr.bf16.mxu0 0
        %531 = vmatpush1.bf16.msra.mxu0 0
        %532 = vmatprep.subr.bf16.mxu0 0
        %533 = vmatpush1.bf16.msra.mxu0 0
        %534 = vmatprep.subr.bf16.mxu0 0
        %535 = vmatpush1.bf16.msra.mxu0 0
        %536 = vmatprep.subr.bf16.mxu0 0
        %537 = vmatpush1.bf16.msra.mxu0 0
        %538 = vmatprep.subr.bf16.mxu0 0
        %539 = vmatpush1.bf16.msra.mxu0 0
        %540 = vmatprep.subr.bf16.mxu0 0
        %541 = vmatpush1.bf16.msra.mxu0 0
        %542 = vmatprep.subr.bf16.mxu0 0
        %543 = vmatpush1.bf16.msra.mxu0 0
        %544 = vmatprep.subr.bf16.mxu0 0
        %545 = vmatpush1.bf16.msra.mxu0 0
        %546 = vmatprep.subr.bf16.mxu0 0
        %547 = vmatpush1.bf16.msra.mxu0 0
        %548 = vmatprep.subr.bf16.mxu0 0
        %549 = vmatpush1.bf16.msra.mxu0 0
        %550 = vmatprep.mubr.bf16.mxu0 0
        %551 = vmatmul.mubr.bf16.gmra.mrb[0].mxu0 %v495
        %v552 = vpop.f32.mrb[0].mxu0
        %v553 = vadd.f32 %v467, %v552
        %v554 = vpop.f32.mrb[0].mxu0
        %v555 = vpop.f32.mrb[0].mxu0
        %v556 = vadd.f32 %v467, %v555
        %v557 = vpop.f32.mrb[0].mxu0
        %558 = vmatprep.mubr.bf16.mxu0 0
        %559 = vmatmul.mubr.bf16.gmra.mrb[0].mxu0 %v498
        %v560 = vpop.f32.mrb[0].mxu0
        %v561 = vadd.f32 %v467, %v560
        %v562 = vpop.f32.mrb[0].mxu0
        %v563 = vpop.f32.mrb[0].mxu0
        %v564 = vadd.f32 %v467, %v563
        %v565 = vpop.f32.mrb[0].mxu0
        %566 = vmatprep.mubr.bf16.mxu0 0
        %567 = vmatmul.mubr.bf16.gmra.mrb[0].mxu0 %v501
        %v568 = vpop.f32.mrb[0].mxu0
        %v569 = vadd.f32 %v467, %v568
        %v570 = vpop.f32.mrb[0].mxu0
        %v571 = vpop.f32.mrb[0].mxu0
        %v572 = vadd.f32 %v467, %v571
        %v573 = vpop.f32.mrb[0].mxu0
        %574 = vmatprep.mubr.bf16.mxu0 0
        %575 = vmatmul.mubr.bf16.gmra.mrb[0].mxu0 %v504
        %v576 = vpop.f32.mrb[0].mxu0
        %v577 = vadd.f32 %v467, %v576
        %v578 = vpop.f32.mrb[0].mxu0
        %v579 = vpop.f32.mrb[0].mxu0
        %v580 = vadd.f32 %v467, %v579
        %v581 = vpop.f32.mrb[0].mxu0
        %582 = vmatprep.mubr.bf16.mxu0 0
        %583 = vmatmul.mubr.bf16.gmra.mrb[0].mxu0 %v507
        %v584 = vpop.f32.mrb[0].mxu0
        %v585 = vadd.f32 %v467, %v584
        %v586 = vpop.f32.mrb[0].mxu0
        %v587 = vpop.f32.mrb[0].mxu0
        %v588 = vadd.f32 %v467, %v587
        %v589 = vpop.f32.mrb[0].mxu0
        %590 = vmatprep.mubr.bf16.mxu0 0
        %591 = vmatmul.mubr.bf16.gmra.mrb[0].mxu0 %v510
        %v592 = vpop.f32.mrb[0].mxu0
        %v593 = vadd.f32 %v467, %v592
        %v594 = vpop.f32.mrb[0].mxu0
        %v595 = vpop.f32.mrb[0].mxu0
        %v596 = vadd.f32 %v467, %v595
        %v597 = vpop.f32.mrb[0].mxu0
        %598 = vmatprep.mubr.bf16.mxu0 0
        %599 = vmatmul.mubr.bf16.gmra.mrb[0].mxu0 %v513
        %v600 = vpop.f32.mrb[0].mxu0
        %v601 = vadd.f32 %v467, %v600
        %v602 = vpop.f32.mrb[0].mxu0
        %v603 = vpop.f32.mrb[0].mxu0
        %v604 = vadd.f32 %v467, %v603
        %v605 = vpop.f32.mrb[0].mxu0
        %606 = vmatprep.mubr.bf16.mxu0 0
        %607 = vmatmul.mubr.bf16.gmra.mrb[0].mxu0 %v516
        %v608 = vpop.f32.mrb[0].mxu0
        %v609 = vadd.f32 %v467, %v608
        %v610 = vpop.f32.mrb[0].mxu0
        %v611 = vpop.f32.mrb[0].mxu0
        %v612 = vadd.f32 %v467, %v611
        %v613 = vpop.f32.mrb[0].mxu0
        %614 = vdwg.mxu0
        %v615 = vld [vmem:[%s3] sm:$0x1]
        %v616 = vld [vmem:[%s4] sm:$0x1]
        %617 = vadd.xlane.f32.xlu0 %v553
        %v618 = vpop.xlane.xlu0 %617
        %619 = vadd.xlane.f32.xlu0 %v556
        %v620 = vpop.xlane.xlu0 %619
        %621 = vadd.xlane.f32.xlu0 %v561
        %v622 = vpop.xlane.xlu0 %621
        %623 = vadd.xlane.f32.xlu0 %v564
        %v624 = vpop.xlane.xlu0 %623
        %625 = vadd.xlane.f32.xlu0 %v569
        %v626 = vpop.xlane.xlu0 %625
        %627 = vadd.xlane.f32.xlu0 %v572
        %v628 = vpop.xlane.xlu0 %627
        %629 = vadd.xlane.f32.xlu0 %v577
        %v630 = vpop.xlane.xlu0 %629
        %631 = vadd.xlane.f32.xlu0 %v580
        %v632 = vpop.xlane.xlu0 %631
        %633 = vadd.xlane.f32.xlu0 %v585
        %v634 = vpop.xlane.xlu0 %633
        %635 = vadd.xlane.f32.xlu0 %v588
        %v636 = vpop.xlane.xlu0 %635
        %637 = vadd.xlane.f32.xlu0 %v593
        %v638 = vpop.xlane.xlu0 %637
        %639 = vadd.xlane.f32.xlu0 %v596
        %v640 = vpop.xlane.xlu0 %639
        %641 = vadd.xlane.f32.xlu0 %v601
        %v642 = vpop.xlane.xlu0 %641
        %643 = vadd.xlane.f32.xlu0 %v604
        %v644 = vpop.xlane.xlu0 %643
        %645 = vadd.xlane.f32.xlu0 %v609
        %v646 = vpop.xlane.xlu0 %645
        %647 = vadd.xlane.f32.xlu0 %v612
        %v648 = vpop.xlane.xlu0 %647
        %v649 = vmul.f32 %v618, 0.0078125
        %v650 = vmul.f32 %v620, 0.0078125
        %v651 = vmul.f32 %v622, 0.0078125
        %v652 = vmul.f32 %v624, 0.0078125
        %v653 = vmul.f32 %v626, 0.0078125
        %v654 = vmul.f32 %v628, 0.0078125
        %v655 = vmul.f32 %v630, 0.0078125
        %v656 = vmul.f32 %v632, 0.0078125
        %v657 = vmul.f32 %v634, 0.0078125
        %v658 = vmul.f32 %v636, 0.0078125
        %v659 = vmul.f32 %v638, 0.0078125
        %v660 = vmul.f32 %v640, 0.0078125
        %v661 = vmul.f32 %v642, 0.0078125
        %v662 = vmul.f32 %v644, 0.0078125
        %v663 = vmul.f32 %v646, 0.0078125
        %v664 = vmul.f32 %v648, 0.0078125
        %v665 = vmul.f32 %v553, %v553
        %v666 = vmul.f32 %v556, %v556
        %v667 = vmul.f32 %v561, %v561
        %v668 = vmul.f32 %v564, %v564
        %v669 = vmul.f32 %v569, %v569
        %v670 = vmul.f32 %v572, %v572
        %v671 = vmul.f32 %v577, %v577
        %v672 = vmul.f32 %v580, %v580
        %v673 = vmul.f32 %v585, %v585
        %v674 = vmul.f32 %v588, %v588
        %v675 = vmul.f32 %v593, %v593
        %v676 = vmul.f32 %v596, %v596
        %v677 = vmul.f32 %v601, %v601
        %v678 = vmul.f32 %v604, %v604
        %v679 = vmul.f32 %v609, %v609
        %v680 = vmul.f32 %v612, %v612
        %681 = vadd.xlane.f32.xlu0 %v665
        %v682 = vpop.xlane.xlu0 %681
        %683 = vadd.xlane.f32.xlu0 %v666
        %v684 = vpop.xlane.xlu0 %683
        %685 = vadd.xlane.f32.xlu0 %v667
        %v686 = vpop.xlane.xlu0 %685
        %687 = vadd.xlane.f32.xlu0 %v668
        %v688 = vpop.xlane.xlu0 %687
        %689 = vadd.xlane.f32.xlu0 %v669
        %v690 = vpop.xlane.xlu0 %689
        %691 = vadd.xlane.f32.xlu0 %v670
        %v692 = vpop.xlane.xlu0 %691
        %693 = vadd.xlane.f32.xlu0 %v671
        %v694 = vpop.xlane.xlu0 %693
        %695 = vadd.xlane.f32.xlu0 %v672
        %v696 = vpop.xlane.xlu0 %695
        %697 = vadd.xlane.f32.xlu0 %v673
        %v698 = vpop.xlane.xlu0 %697
        %699 = vadd.xlane.f32.xlu0 %v674
        %v700 = vpop.xlane.xlu0 %699
        %701 = vadd.xlane.f32.xlu0 %v675
        %v702 = vpop.xlane.xlu0 %701
        %703 = vadd.xlane.f32.xlu0 %v676
        %v704 = vpop.xlane.xlu0 %703
        %705 = vadd.xlane.f32.xlu0 %v677
        %v706 = vpop.xlane.xlu0 %705
        %707 = vadd.xlane.f32.xlu0 %v678
        %v708 = vpop.xlane.xlu0 %707
        %709 = vadd.xlane.f32.xlu0 %v679
        %v710 = vpop.xlane.xlu0 %709
        %711 = vadd.xlane.f32.xlu0 %v680
        %v712 = vpop.xlane.xlu0 %711
        %v713 = vmul.f32 %v682, 0.0078125
        %v714 = vmul.f32 %v684, 0.0078125
        %v715 = vmul.f32 %v686, 0.0078125
        %v716 = vmul.f32 %v688, 0.0078125
        %v717 = vmul.f32 %v690, 0.0078125
        %v718 = vmul.f32 %v692, 0.0078125
        %v719 = vmul.f32 %v694, 0.0078125
        %v720 = vmul.f32 %v696, 0.0078125
        %v721 = vmul.f32 %v698, 0.0078125
        %v722 = vmul.f32 %v700, 0.0078125
        %v723 = vmul.f32 %v702, 0.0078125
        %v724 = vmul.f32 %v704, 0.0078125
        %v725 = vmul.f32 %v706, 0.0078125
        %v726 = vmul.f32 %v708, 0.0078125
        %v727 = vmul.f32 %v710, 0.0078125
        %v728 = vmul.f32 %v712, 0.0078125
        %v729 = vmul.f32 %v649, %v649
        %v730 = vmul.f32 %v650, %v650
        %v731 = vmul.f32 %v651, %v651
        %v732 = vmul.f32 %v652, %v652
        %v733 = vmul.f32 %v653, %v653
        %v734 = vmul.f32 %v654, %v654
        %v735 = vmul.f32 %v655, %v655
        %v736 = vmul.f32 %v656, %v656
        %v737 = vmul.f32 %v657, %v657
        %v738 = vmul.f32 %v658, %v658
        %v739 = vmul.f32 %v659, %v659
        %v740 = vmul.f32 %v660, %v660
        %v741 = vmul.f32 %v661, %v661
        %v742 = vmul.f32 %v662, %v662
        %v743 = vmul.f32 %v663, %v663
        %v744 = vmul.f32 %v664, %v664
        %v745 = vsub.f32 %v713, %v729
        %v746 = vsub.f32 %v714, %v730
        %v747 = vsub.f32 %v715, %v731
        %v748 = vsub.f32 %v716, %v732
        %v749 = vsub.f32 %v717, %v733
        %v750 = vsub.f32 %v718, %v734
        %v751 = vsub.f32 %v719, %v735
        %v752 = vsub.f32 %v720, %v736
        %v753 = vsub.f32 %v721, %v737
        %v754 = vsub.f32 %v722, %v738
        %v755 = vsub.f32 %v723, %v739
        %v756 = vsub.f32 %v724, %v740
        %v757 = vsub.f32 %v725, %v741
        %v758 = vsub.f32 %v726, %v742
        %v759 = vsub.f32 %v727, %v743
        %v760 = vsub.f32 %v728, %v744
        %v761 = vadd.f32 %v745, 1e-05
        %v762 = vadd.f32 %v746, 1e-05
        %v763 = vadd.f32 %v747, 1e-05
        %v764 = vadd.f32 %v748, 1e-05
        %v765 = vadd.f32 %v749, 1e-05
        %v766 = vadd.f32 %v750, 1e-05
        %v767 = vadd.f32 %v751, 1e-05
        %v768 = vadd.f32 %v752, 1e-05
        %v769 = vadd.f32 %v753, 1e-05
        %v770 = vadd.f32 %v754, 1e-05
        %v771 = vadd.f32 %v755, 1e-05
        %v772 = vadd.f32 %v756, 1e-05
        %v773 = vadd.f32 %v757, 1e-05
        %v774 = vadd.f32 %v758, 1e-05
        %v775 = vadd.f32 %v759, 1e-05
        %v776 = vadd.f32 %v760, 1e-05
        %v777 = vrsqrt.pop %v761
        %v778 = vrsqrt.pop %v762
        %v779 = vrsqrt.pop %v763
        %v780 = vrsqrt.pop %v764
        %v781 = vrsqrt.pop %v765
        %v782 = vrsqrt.pop %v766
        %v783 = vrsqrt.pop %v767
        %v784 = vrsqrt.pop %v768
        %v785 = vrsqrt.pop %v769
        %v786 = vrsqrt.pop %v770
        %v787 = vrsqrt.pop %v771
        %v788 = vrsqrt.pop %v772
        %v789 = vrsqrt.pop %v773
        %v790 = vrsqrt.pop %v774
        %v791 = vrsqrt.pop %v775
        %v792 = vrsqrt.pop %v776
        %v793 = vsub.f32 %v553, %v649
        %v794 = vsub.f32 %v556, %v650
        %v795 = vsub.f32 %v561, %v651
        %v796 = vsub.f32 %v564, %v652
        %v797 = vsub.f32 %v569, %v653
        %v798 = vsub.f32 %v572, %v654
        %v799 = vsub.f32 %v577, %v655
        %v800 = vsub.f32 %v580, %v656
        %v801 = vsub.f32 %v585, %v657
        %v802 = vsub.f32 %v588, %v658
        %v803 = vsub.f32 %v593, %v659
        %v804 = vsub.f32 %v596, %v660
        %v805 = vsub.f32 %v601, %v661
        %v806 = vsub.f32 %v604, %v662
        %v807 = vsub.f32 %v609, %v663
        %v808 = vsub.f32 %v612, %v664
        %v809 = vmul.f32 %v793, %v777
        %v810 = vmul.f32 %v794, %v778
        %v811 = vmul.f32 %v795, %v779
        %v812 = vmul.f32 %v796, %v780
        %v813 = vmul.f32 %v797, %v781
        %v814 = vmul.f32 %v798, %v782
        %v815 = vmul.f32 %v799, %v783
        %v816 = vmul.f32 %v800, %v784
        %v817 = vmul.f32 %v801, %v785
        %v818 = vmul.f32 %v802, %v786
        %v819 = vmul.f32 %v803, %v787
        %v820 = vmul.f32 %v804, %v788
        %v821 = vmul.f32 %v805, %v789
        %v822 = vmul.f32 %v806, %v790
        %v823 = vmul.f32 %v807, %v791
        %v824 = vmul.f32 %v808, %v792
        %v826 = vlaneseq
        %v827 = vshrl.u32 %v826, 7
        %v828 = vsub.s32 0, %v827
        %v829 = vrot.slane %v615, %v828
        %v831 = vmul.f32 %v809, %v829
        %v832 = vmul.f32 %v810, %v829
        %v833 = vmul.f32 %v811, %v829
        %v834 = vmul.f32 %v812, %v829
        %v835 = vmul.f32 %v813, %v829
        %v836 = vmul.f32 %v814, %v829
        %v837 = vmul.f32 %v815, %v829
        %v838 = vmul.f32 %v816, %v829
        %v839 = vmul.f32 %v817, %v829
        %v840 = vmul.f32 %v818, %v829
        %v841 = vmul.f32 %v819, %v829
        %v842 = vmul.f32 %v820, %v829
        %v843 = vmul.f32 %v821, %v829
        %v844 = vmul.f32 %v822, %v829
        %v845 = vmul.f32 %v823, %v829
        %v846 = vmul.f32 %v824, %v829
        %v848 = vlaneseq
        %v849 = vshrl.u32 %v848, 7
        %v850 = vsub.s32 0, %v849
        %v851 = vrot.slane %v616, %v850
        %v853 = vadd.f32 %v831, %v851
        %v854 = vadd.f32 %v832, %v851
        %v855 = vadd.f32 %v833, %v851
        %v856 = vadd.f32 %v834, %v851
        %v857 = vadd.f32 %v835, %v851
        %v858 = vadd.f32 %v836, %v851
        %v859 = vadd.f32 %v837, %v851
        %v860 = vadd.f32 %v838, %v851
        %v861 = vadd.f32 %v839, %v851
        %v862 = vadd.f32 %v840, %v851
        %v863 = vadd.f32 %v841, %v851
        %v864 = vadd.f32 %v842, %v851
        %v865 = vadd.f32 %v843, %v851
        %v866 = vadd.f32 %v844, %v851
        %v867 = vadd.f32 %v845, %v851
        %v868 = vadd.f32 %v846, %v851
        %s869 = sld [smem:[#allocation2]]
        %vm870 = vcmp.ge.f32.partialorder %v853, 0.0
        %vm871 = vcmp.ge.f32.partialorder %v854, 0.0
        %vm872 = vcmp.ge.f32.partialorder %v855, 0.0
        %vm873 = vcmp.ge.f32.partialorder %v856, 0.0
        %vm874 = vcmp.ge.f32.partialorder %v857, 0.0
        %vm875 = vcmp.ge.f32.partialorder %v858, 0.0
        %vm876 = vcmp.ge.f32.partialorder %v859, 0.0
        %vm877 = vcmp.ge.f32.partialorder %v860, 0.0
        %vm878 = vcmp.ge.f32.partialorder %v861, 0.0
        %vm879 = vcmp.ge.f32.partialorder %v862, 0.0
        %vm880 = vcmp.ge.f32.partialorder %v863, 0.0
        %vm881 = vcmp.ge.f32.partialorder %v864, 0.0
        %vm882 = vcmp.ge.f32.partialorder %v865, 0.0
        %vm883 = vcmp.ge.f32.partialorder %v866, 0.0
        %vm884 = vcmp.ge.f32.partialorder %v867, 0.0
        %vm885 = vcmp.ge.f32.partialorder %v868, 0.0
        %v886 = vstv %s869
        %v887 = vmul.f32 %v886, %v853
        %v888 = vmul.f32 %v886, %v854
        %v889 = vmul.f32 %v886, %v855
        %v890 = vmul.f32 %v886, %v856
        %v891 = vmul.f32 %v886, %v857
        %v892 = vmul.f32 %v886, %v858
        %v893 = vmul.f32 %v886, %v859
        %v894 = vmul.f32 %v886, %v860
        %v895 = vmul.f32 %v886, %v861
        %v896 = vmul.f32 %v886, %v862
        %v897 = vmul.f32 %v886, %v863
        %v898 = vmul.f32 %v886, %v864
        %v899 = vmul.f32 %v886, %v865
        %v900 = vmul.f32 %v886, %v866
        %v901 = vmul.f32 %v886, %v867
        %v902 = vmul.f32 %v886, %v868
        %v903 = vsel %vm870, %v853, %v887
        %v904 = vsel %vm871, %v854, %v888
        %v905 = vsel %vm872, %v855, %v889
        %v906 = vsel %vm873, %v856, %v890
        %v907 = vsel %vm874, %v857, %v891
        %v908 = vsel %vm875, %v858, %v892
        %v909 = vsel %vm876, %v859, %v893
        %v910 = vsel %vm877, %v860, %v894
        %v911 = vsel %vm878, %v861, %v895
        %v912 = vsel %vm879, %v862, %v896
        %v913 = vsel %vm880, %v863, %v897
        %v914 = vsel %vm881, %v864, %v898
        %v915 = vsel %vm882, %v865, %v899
        %v916 = vsel %vm883, %v866, %v900
        %v917 = vsel %vm884, %v867, %v901
        %v918 = vsel %vm885, %v868, %v902
        %v919 = vpack.c.bf16 %v904, %v903
        %v920 = vpack.c.bf16 %v906, %v905
        %v921 = vpack.c.bf16 %v908, %v907
        %v922 = vpack.c.bf16 %v910, %v909
        %v923 = vpack.c.bf16 %v912, %v911
        %v924 = vpack.c.bf16 %v914, %v913
        %v925 = vpack.c.bf16 %v916, %v915
        %v926 = vpack.c.bf16 %v918, %v917
        %v927 = vld [vmem:[%s5] sm:$0xf]
        %v928 = vld [vmem:[%s5 + $0x4] sm:$0xf]
        %v929 = vld [vmem:[%s5 + $0x8] sm:$0xf]
        %v930 = vld [vmem:[%s5 + $0xc] sm:$0xf]
        %v931 = vld [vmem:[%s5 + $0x10] sm:$0xf]
        %v932 = vld [vmem:[%s5 + $0x14] sm:$0xf]
        %v933 = vld [vmem:[%s5 + $0x18] sm:$0xf]
        %v934 = vld [vmem:[%s5 + $0x1c] sm:$0xf]
        %v935 = vld [vmem:[%s5 + $0x20] sm:$0xf]
        %v936 = vld [vmem:[%s5 + $0x24] sm:$0xf]
        %v937 = vld [vmem:[%s5 + $0x28] sm:$0xf]
        %v938 = vld [vmem:[%s5 + $0x2c] sm:$0xf]
        %v939 = vld [vmem:[%s5 + $0x30] sm:$0xf]
        %v940 = vld [vmem:[%s5 + $0x34] sm:$0xf]
        %v941 = vld [vmem:[%s5 + $0x38] sm:$0xf]
        %v942 = vld [vmem:[%s5 + $0x3c] sm:$0xf]
        %v943 = vld [vmem:[%s6] sm:$0x1]
        %v945 = vlaneseq
        %v946 = vshrl.u32 %v945, 7
        %v947 = vsub.s32 0, %v946
        %v948 = vrot.slane %v943, %v947
        %v966 = vunpack.c.l.b16 %v927
        %v967 = vunpack.c.l.b16 %v928
        %v968 = vunpack.c.l.b16 %v929
        %v969 = vunpack.c.l.b16 %v930
        %v970 = vunpack.c.l.b16 %v931
        %v971 = vunpack.c.l.b16 %v932
        %v972 = vunpack.c.l.b16 %v933
        %v973 = vunpack.c.l.b16 %v934
        %v974 = vunpack.c.l.b16 %v935
        %v975 = vunpack.c.l.b16 %v936
        %v976 = vunpack.c.l.b16 %v937
        %v977 = vunpack.c.l.b16 %v938
        %v978 = vunpack.c.l.b16 %v939
        %v979 = vunpack.c.l.b16 %v940
        %v980 = vunpack.c.l.b16 %v941
        %v981 = vunpack.c.l.b16 %v942
        %v982 = vpack.c.b16 %v967, %v966
        %v983 = vpack.c.b16 %v969, %v968
        %v984 = vpack.c.b16 %v971, %v970
        %v985 = vpack.c.b16 %v973, %v972
        %v986 = vpack.c.b16 %v975, %v974
        %v987 = vpack.c.b16 %v977, %v976
        %v988 = vpack.c.b16 %v979, %v978
        %v989 = vpack.c.b16 %v981, %v980
        %998 = vmatprep.subr.bf16.mxu0 0
        %999 = vmatpush1.bf16.msra.mxu0 %v982
        %1000 = vmatprep.subr.bf16.mxu0 0
        %1001 = vmatpush1.bf16.msra.mxu0 %v983
        %1002 = vmatprep.subr.bf16.mxu0 0
        %1003 = vmatpush1.bf16.msra.mxu0 %v984
        %1004 = vmatprep.subr.bf16.mxu0 0
        %1005 = vmatpush1.bf16.msra.mxu0 %v985
        %1006 = vmatprep.subr.bf16.mxu0 0
        %1007 = vmatpush1.bf16.msra.mxu0 %v986
        %1008 = vmatprep.subr.bf16.mxu0 0
        %1009 = vmatpush1.bf16.msra.mxu0 %v987
        %1010 = vmatprep.subr.bf16.mxu0 0
        %1011 = vmatpush1.bf16.msra.mxu0 %v988
        %1012 = vmatprep.subr.bf16.mxu0 0
        %1013 = vmatpush1.bf16.msra.mxu0 %v989
        %1014 = vmatprep.subr.bf16.mxu0 0
        %1015 = vmatpush1.bf16.msra.mxu0 0
        %1016 = vmatprep.subr.bf16.mxu0 0
        %1017 = vmatpush1.bf16.msra.mxu0 0
        %1018 = vmatprep.subr.bf16.mxu0 0
        %1019 = vmatpush1.bf16.msra.mxu0 0
        %1020 = vmatprep.subr.bf16.mxu0 0
        %1021 = vmatpush1.bf16.msra.mxu0 0
        %1022 = vmatprep.subr.bf16.mxu0 0
        %1023 = vmatpush1.bf16.msra.mxu0 0
        %1024 = vmatprep.subr.bf16.mxu0 0
        %1025 = vmatpush1.bf16.msra.mxu0 0
        %1026 = vmatprep.subr.bf16.mxu0 0
        %1027 = vmatpush1.bf16.msra.mxu0 0
        %1028 = vmatprep.subr.bf16.mxu0 0
        %1029 = vmatpush1.bf16.msra.mxu0 0
        %1030 = vmatprep.mubr.bf16.mxu0 0
        %1031 = vmatmul.mubr.bf16.gmra.mrb[0].mxu0 %v919
        %v1032 = vpop.f32.mrb[0].mxu0
        %v1033 = vadd.f32 %v948, %v1032
        %v1034 = vpop.f32.mrb[0].mxu0
        %v1035 = vpop.f32.mrb[0].mxu0
        %v1036 = vadd.f32 %v948, %v1035
        %v1037 = vpop.f32.mrb[0].mxu0
        %1038 = vmatprep.mubr.bf16.mxu0 0
        %1039 = vmatmul.mubr.bf16.gmra.mrb[0].mxu0 %v920
        %v1040 = vpop.f32.mrb[0].mxu0
        %v1041 = vadd.f32 %v948, %v1040
        %v1042 = vpop.f32.mrb[0].mxu0
        %v1043 = vpop.f32.mrb[0].mxu0
        %v1044 = vadd.f32 %v948, %v1043
        %v1045 = vpop.f32.mrb[0].mxu0
        %1046 = vmatprep.mubr.bf16.mxu0 0
        %1047 = vmatmul.mubr.bf16.gmra.mrb[0].mxu0 %v921
        %v1048 = vpop.f32.mrb[0].mxu0
        %v1049 = vadd.f32 %v948, %v1048
        %v1050 = vpop.f32.mrb[0].mxu0
        %v1051 = vpop.f32.mrb[0].mxu0
        %v1052 = vadd.f32 %v948, %v1051
        %v1053 = vpop.f32.mrb[0].mxu0
        %1054 = vmatprep.mubr.bf16.mxu0 0
        %1055 = vmatmul.mubr.bf16.gmra.mrb[0].mxu0 %v922
        %v1056 = vpop.f32.mrb[0].mxu0
        %v1057 = vadd.f32 %v948, %v1056
        %v1058 = vpop.f32.mrb[0].mxu0
        %v1059 = vpop.f32.mrb[0].mxu0
        %v1060 = vadd.f32 %v948, %v1059
        %v1061 = vpop.f32.mrb[0].mxu0
        %1062 = vmatprep.mubr.bf16.mxu0 0
        %1063 = vmatmul.mubr.bf16.gmra.mrb[0].mxu0 %v923
        %v1064 = vpop.f32.mrb[0].mxu0
        %v1065 = vadd.f32 %v948, %v1064
        %v1066 = vpop.f32.mrb[0].mxu0
        %v1067 = vpop.f32.mrb[0].mxu0
        %v1068 = vadd.f32 %v948, %v1067
        %v1069 = vpop.f32.mrb[0].mxu0
        %1070 = vmatprep.mubr.bf16.mxu0 0
        %1071 = vmatmul.mubr.bf16.gmra.mrb[0].mxu0 %v924
        %v1072 = vpop.f32.mrb[0].mxu0
        %v1073 = vadd.f32 %v948, %v1072
        %v1074 = vpop.f32.mrb[0].mxu0
        %v1075 = vpop.f32.mrb[0].mxu0
        %v1076 = vadd.f32 %v948, %v1075
        %v1077 = vpop.f32.mrb[0].mxu0
        %1078 = vmatprep.mubr.bf16.mxu0 0
        %1079 = vmatmul.mubr.bf16.gmra.mrb[0].mxu0 %v925
        %v1080 = vpop.f32.mrb[0].mxu0
        %v1081 = vadd.f32 %v948, %v1080
        %v1082 = vpop.f32.mrb[0].mxu0
        %v1083 = vpop.f32.mrb[0].mxu0
        %v1084 = vadd.f32 %v948, %v1083
        %v1085 = vpop.f32.mrb[0].mxu0
        %1086 = vmatprep.mubr.bf16.mxu0 0
        %1087 = vmatmul.mubr.bf16.gmra.mrb[0].mxu0 %v926
        %v1088 = vpop.f32.mrb[0].mxu0
        %v1089 = vadd.f32 %v948, %v1088
        %v1090 = vpop.f32.mrb[0].mxu0
        %v1091 = vpop.f32.mrb[0].mxu0
        %v1092 = vadd.f32 %v948, %v1091
        %v1093 = vpop.f32.mrb[0].mxu0
        %1094 = vdwg.mxu0
        %v1095 = vld [vmem:[%s7] sm:$0x1]
        %v1096 = vld [vmem:[%s8] sm:$0x1]
        %1097 = vadd.xlane.f32.xlu0 %v1033
        %v1098 = vpop.xlane.xlu0 %1097
        %1099 = vadd.xlane.f32.xlu0 %v1036
        %v1100 = vpop.xlane.xlu0 %1099
        %1101 = vadd.xlane.f32.xlu0 %v1041
        %v1102 = vpop.xlane.xlu0 %1101
        %1103 = vadd.xlane.f32.xlu0 %v1044
        %v1104 = vpop.xlane.xlu0 %1103
        %1105 = vadd.xlane.f32.xlu0 %v1049
        %v1106 = vpop.xlane.xlu0 %1105
        %1107 = vadd.xlane.f32.xlu0 %v1052
        %v1108 = vpop.xlane.xlu0 %1107
        %1109 = vadd.xlane.f32.xlu0 %v1057
        %v1110 = vpop.xlane.xlu0 %1109
        %1111 = vadd.xlane.f32.xlu0 %v1060
        %v1112 = vpop.xlane.xlu0 %1111
        %1113 = vadd.xlane.f32.xlu0 %v1065
        %v1114 = vpop.xlane.xlu0 %1113
        %1115 = vadd.xlane.f32.xlu0 %v1068
        %v1116 = vpop.xlane.xlu0 %1115
        %1117 = vadd.xlane.f32.xlu0 %v1073
        %v1118 = vpop.xlane.xlu0 %1117
        %1119 = vadd.xlane.f32.xlu0 %v1076
        %v1120 = vpop.xlane.xlu0 %1119
        %1121 = vadd.xlane.f32.xlu0 %v1081
        %v1122 = vpop.xlane.xlu0 %1121
        %1123 = vadd.xlane.f32.xlu0 %v1084
        %v1124 = vpop.xlane.xlu0 %1123
        %1125 = vadd.xlane.f32.xlu0 %v1089
        %v1126 = vpop.xlane.xlu0 %1125
        %1127 = vadd.xlane.f32.xlu0 %v1092
        %v1128 = vpop.xlane.xlu0 %1127
        %v1129 = vmul.f32 %v1098, 0.0078125
        %v1130 = vmul.f32 %v1100, 0.0078125
        %v1131 = vmul.f32 %v1102, 0.0078125
        %v1132 = vmul.f32 %v1104, 0.0078125
        %v1133 = vmul.f32 %v1106, 0.0078125
        %v1134 = vmul.f32 %v1108, 0.0078125
        %v1135 = vmul.f32 %v1110, 0.0078125
        %v1136 = vmul.f32 %v1112, 0.0078125
        %v1137 = vmul.f32 %v1114, 0.0078125
        %v1138 = vmul.f32 %v1116, 0.0078125
        %v1139 = vmul.f32 %v1118, 0.0078125
        %v1140 = vmul.f32 %v1120, 0.0078125
        %v1141 = vmul.f32 %v1122, 0.0078125
        %v1142 = vmul.f32 %v1124, 0.0078125
        %v1143 = vmul.f32 %v1126, 0.0078125
        %v1144 = vmul.f32 %v1128, 0.0078125
        %v1145 = vmul.f32 %v1033, %v1033
        %v1146 = vmul.f32 %v1036, %v1036
        %v1147 = vmul.f32 %v1041, %v1041
        %v1148 = vmul.f32 %v1044, %v1044
        %v1149 = vmul.f32 %v1049, %v1049
        %v1150 = vmul.f32 %v1052, %v1052
        %v1151 = vmul.f32 %v1057, %v1057
        %v1152 = vmul.f32 %v1060, %v1060
        %v1153 = vmul.f32 %v1065, %v1065
        %v1154 = vmul.f32 %v1068, %v1068
        %v1155 = vmul.f32 %v1073, %v1073
        %v1156 = vmul.f32 %v1076, %v1076
        %v1157 = vmul.f32 %v1081, %v1081
        %v1158 = vmul.f32 %v1084, %v1084
        %v1159 = vmul.f32 %v1089, %v1089
        %v1160 = vmul.f32 %v1092, %v1092
        %1161 = vadd.xlane.f32.xlu0 %v1145
        %v1162 = vpop.xlane.xlu0 %1161
        %1163 = vadd.xlane.f32.xlu0 %v1146
        %v1164 = vpop.xlane.xlu0 %1163
        %1165 = vadd.xlane.f32.xlu0 %v1147
        %v1166 = vpop.xlane.xlu0 %1165
        %1167 = vadd.xlane.f32.xlu0 %v1148
        %v1168 = vpop.xlane.xlu0 %1167
        %1169 = vadd.xlane.f32.xlu0 %v1149
        %v1170 = vpop.xlane.xlu0 %1169
        %1171 = vadd.xlane.f32.xlu0 %v1150
        %v1172 = vpop.xlane.xlu0 %1171
        %1173 = vadd.xlane.f32.xlu0 %v1151
        %v1174 = vpop.xlane.xlu0 %1173
        %1175 = vadd.xlane.f32.xlu0 %v1152
        %v1176 = vpop.xlane.xlu0 %1175
        %1177 = vadd.xlane.f32.xlu0 %v1153
        %v1178 = vpop.xlane.xlu0 %1177
        %1179 = vadd.xlane.f32.xlu0 %v1154
        %v1180 = vpop.xlane.xlu0 %1179
        %1181 = vadd.xlane.f32.xlu0 %v1155
        %v1182 = vpop.xlane.xlu0 %1181
        %1183 = vadd.xlane.f32.xlu0 %v1156
        %v1184 = vpop.xlane.xlu0 %1183
        %1185 = vadd.xlane.f32.xlu0 %v1157
        %v1186 = vpop.xlane.xlu0 %1185
        %1187 = vadd.xlane.f32.xlu0 %v1158
        %v1188 = vpop.xlane.xlu0 %1187
        %1189 = vadd.xlane.f32.xlu0 %v1159
        %v1190 = vpop.xlane.xlu0 %1189
        %1191 = vadd.xlane.f32.xlu0 %v1160
        %v1192 = vpop.xlane.xlu0 %1191
        %v1193 = vmul.f32 %v1162, 0.0078125
        %v1194 = vmul.f32 %v1164, 0.0078125
        %v1195 = vmul.f32 %v1166, 0.0078125
        %v1196 = vmul.f32 %v1168, 0.0078125
        %v1197 = vmul.f32 %v1170, 0.0078125
        %v1198 = vmul.f32 %v1172, 0.0078125
        %v1199 = vmul.f32 %v1174, 0.0078125
        %v1200 = vmul.f32 %v1176, 0.0078125
        %v1201 = vmul.f32 %v1178, 0.0078125
        %v1202 = vmul.f32 %v1180, 0.0078125
        %v1203 = vmul.f32 %v1182, 0.0078125
        %v1204 = vmul.f32 %v1184, 0.0078125
        %v1205 = vmul.f32 %v1186, 0.0078125
        %v1206 = vmul.f32 %v1188, 0.0078125
        %v1207 = vmul.f32 %v1190, 0.0078125
        %v1208 = vmul.f32 %v1192, 0.0078125
        %v1209 = vmul.f32 %v1129, %v1129
        %v1210 = vmul.f32 %v1130, %v1130
        %v1211 = vmul.f32 %v1131, %v1131
        %v1212 = vmul.f32 %v1132, %v1132
        %v1213 = vmul.f32 %v1133, %v1133
        %v1214 = vmul.f32 %v1134, %v1134
        %v1215 = vmul.f32 %v1135, %v1135
        %v1216 = vmul.f32 %v1136, %v1136
        %v1217 = vmul.f32 %v1137, %v1137
        %v1218 = vmul.f32 %v1138, %v1138
        %v1219 = vmul.f32 %v1139, %v1139
        %v1220 = vmul.f32 %v1140, %v1140
        %v1221 = vmul.f32 %v1141, %v1141
        %v1222 = vmul.f32 %v1142, %v1142
        %v1223 = vmul.f32 %v1143, %v1143
        %v1224 = vmul.f32 %v1144, %v1144
        %v1225 = vsub.f32 %v1193, %v1209
        %v1226 = vsub.f32 %v1194, %v1210
        %v1227 = vsub.f32 %v1195, %v1211
        %v1228 = vsub.f32 %v1196, %v1212
        %v1229 = vsub.f32 %v1197, %v1213
        %v1230 = vsub.f32 %v1198, %v1214
        %v1231 = vsub.f32 %v1199, %v1215
        %v1232 = vsub.f32 %v1200, %v1216
        %v1233 = vsub.f32 %v1201, %v1217
        %v1234 = vsub.f32 %v1202, %v1218
        %v1235 = vsub.f32 %v1203, %v1219
        %v1236 = vsub.f32 %v1204, %v1220
        %v1237 = vsub.f32 %v1205, %v1221
        %v1238 = vsub.f32 %v1206, %v1222
        %v1239 = vsub.f32 %v1207, %v1223
        %v1240 = vsub.f32 %v1208, %v1224
        %v1241 = vadd.f32 %v1225, 1e-05
        %v1242 = vadd.f32 %v1226, 1e-05
        %v1243 = vadd.f32 %v1227, 1e-05
        %v1244 = vadd.f32 %v1228, 1e-05
        %v1245 = vadd.f32 %v1229, 1e-05
        %v1246 = vadd.f32 %v1230, 1e-05
        %v1247 = vadd.f32 %v1231, 1e-05
        %v1248 = vadd.f32 %v1232, 1e-05
        %v1249 = vadd.f32 %v1233, 1e-05
        %v1250 = vadd.f32 %v1234, 1e-05
        %v1251 = vadd.f32 %v1235, 1e-05
        %v1252 = vadd.f32 %v1236, 1e-05
        %v1253 = vadd.f32 %v1237, 1e-05
        %v1254 = vadd.f32 %v1238, 1e-05
        %v1255 = vadd.f32 %v1239, 1e-05
        %v1256 = vadd.f32 %v1240, 1e-05
        %v1257 = vrsqrt.pop %v1241
        %v1258 = vrsqrt.pop %v1242
        %v1259 = vrsqrt.pop %v1243
        %v1260 = vrsqrt.pop %v1244
        %v1261 = vrsqrt.pop %v1245
        %v1262 = vrsqrt.pop %v1246
        %v1263 = vrsqrt.pop %v1247
        %v1264 = vrsqrt.pop %v1248
        %v1265 = vrsqrt.pop %v1249
        %v1266 = vrsqrt.pop %v1250
        %v1267 = vrsqrt.pop %v1251
        %v1268 = vrsqrt.pop %v1252
        %v1269 = vrsqrt.pop %v1253
        %v1270 = vrsqrt.pop %v1254
        %v1271 = vrsqrt.pop %v1255
        %v1272 = vrsqrt.pop %v1256
        %v1273 = vsub.f32 %v1033, %v1129
        %v1274 = vsub.f32 %v1036, %v1130
        %v1275 = vsub.f32 %v1041, %v1131
        %v1276 = vsub.f32 %v1044, %v1132
        %v1277 = vsub.f32 %v1049, %v1133
        %v1278 = vsub.f32 %v1052, %v1134
        %v1279 = vsub.f32 %v1057, %v1135
        %v1280 = vsub.f32 %v1060, %v1136
        %v1281 = vsub.f32 %v1065, %v1137
        %v1282 = vsub.f32 %v1068, %v1138
        %v1283 = vsub.f32 %v1073, %v1139
        %v1284 = vsub.f32 %v1076, %v1140
        %v1285 = vsub.f32 %v1081, %v1141
        %v1286 = vsub.f32 %v1084, %v1142
        %v1287 = vsub.f32 %v1089, %v1143
        %v1288 = vsub.f32 %v1092, %v1144
        %v1289 = vmul.f32 %v1273, %v1257
        %v1290 = vmul.f32 %v1274, %v1258
        %v1291 = vmul.f32 %v1275, %v1259
        %v1292 = vmul.f32 %v1276, %v1260
        %v1293 = vmul.f32 %v1277, %v1261
        %v1294 = vmul.f32 %v1278, %v1262
        %v1295 = vmul.f32 %v1279, %v1263
        %v1296 = vmul.f32 %v1280, %v1264
        %v1297 = vmul.f32 %v1281, %v1265
        %v1298 = vmul.f32 %v1282, %v1266
        %v1299 = vmul.f32 %v1283, %v1267
        %v1300 = vmul.f32 %v1284, %v1268
        %v1301 = vmul.f32 %v1285, %v1269
        %v1302 = vmul.f32 %v1286, %v1270
        %v1303 = vmul.f32 %v1287, %v1271
        %v1304 = vmul.f32 %v1288, %v1272
        %v1306 = vlaneseq
        %v1307 = vshrl.u32 %v1306, 7
        %v1308 = vsub.s32 0, %v1307
        %v1309 = vrot.slane %v1095, %v1308
        %v1311 = vmul.f32 %v1289, %v1309
        %v1312 = vmul.f32 %v1290, %v1309
        %v1313 = vmul.f32 %v1291, %v1309
        %v1314 = vmul.f32 %v1292, %v1309
        %v1315 = vmul.f32 %v1293, %v1309
        %v1316 = vmul.f32 %v1294, %v1309
        %v1317 = vmul.f32 %v1295, %v1309
        %v1318 = vmul.f32 %v1296, %v1309
        %v1319 = vmul.f32 %v1297, %v1309
        %v1320 = vmul.f32 %v1298, %v1309
        %v1321 = vmul.f32 %v1299, %v1309
        %v1322 = vmul.f32 %v1300, %v1309
        %v1323 = vmul.f32 %v1301, %v1309
        %v1324 = vmul.f32 %v1302, %v1309
        %v1325 = vmul.f32 %v1303, %v1309
        %v1326 = vmul.f32 %v1304, %v1309
        %v1328 = vlaneseq
        %v1329 = vshrl.u32 %v1328, 7
        %v1330 = vsub.s32 0, %v1329
        %v1331 = vrot.slane %v1096, %v1330
        %v1333 = vadd.f32 %v1311, %v1331
        %v1334 = vadd.f32 %v1312, %v1331
        %v1335 = vadd.f32 %v1313, %v1331
        %v1336 = vadd.f32 %v1314, %v1331
        %v1337 = vadd.f32 %v1315, %v1331
        %v1338 = vadd.f32 %v1316, %v1331
        %v1339 = vadd.f32 %v1317, %v1331
        %v1340 = vadd.f32 %v1318, %v1331
        %v1341 = vadd.f32 %v1319, %v1331
        %v1342 = vadd.f32 %v1320, %v1331
        %v1343 = vadd.f32 %v1321, %v1331
        %v1344 = vadd.f32 %v1322, %v1331
        %v1345 = vadd.f32 %v1323, %v1331
        %v1346 = vadd.f32 %v1324, %v1331
        %v1347 = vadd.f32 %v1325, %v1331
        %v1348 = vadd.f32 %v1326, %v1331
        %s1349 = sld [smem:[#allocation2 + $0x1]]
        %vm1350 = vcmp.ge.f32.partialorder %v1333, 0.0
        %vm1351 = vcmp.ge.f32.partialorder %v1334, 0.0
        %vm1352 = vcmp.ge.f32.partialorder %v1335, 0.0
        %vm1353 = vcmp.ge.f32.partialorder %v1336, 0.0
        %vm1354 = vcmp.ge.f32.partialorder %v1337, 0.0
        %vm1355 = vcmp.ge.f32.partialorder %v1338, 0.0
        %vm1356 = vcmp.ge.f32.partialorder %v1339, 0.0
        %vm1357 = vcmp.ge.f32.partialorder %v1340, 0.0
        %vm1358 = vcmp.ge.f32.partialorder %v1341, 0.0
        %vm1359 = vcmp.ge.f32.partialorder %v1342, 0.0
        %vm1360 = vcmp.ge.f32.partialorder %v1343, 0.0
        %vm1361 = vcmp.ge.f32.partialorder %v1344, 0.0
        %vm1362 = vcmp.ge.f32.partialorder %v1345, 0.0
        %vm1363 = vcmp.ge.f32.partialorder %v1346, 0.0
        %vm1364 = vcmp.ge.f32.partialorder %v1347, 0.0
        %vm1365 = vcmp.ge.f32.partialorder %v1348, 0.0
        %v1366 = vstv %s1349
        %v1367 = vmul.f32 %v1366, %v1333
        %v1368 = vmul.f32 %v1366, %v1334
        %v1369 = vmul.f32 %v1366, %v1335
        %v1370 = vmul.f32 %v1366, %v1336
        %v1371 = vmul.f32 %v1366, %v1337
        %v1372 = vmul.f32 %v1366, %v1338
        %v1373 = vmul.f32 %v1366, %v1339
        %v1374 = vmul.f32 %v1366, %v1340
        %v1375 = vmul.f32 %v1366, %v1341
        %v1376 = vmul.f32 %v1366, %v1342
        %v1377 = vmul.f32 %v1366, %v1343
        %v1378 = vmul.f32 %v1366, %v1344
        %v1379 = vmul.f32 %v1366, %v1345
        %v1380 = vmul.f32 %v1366, %v1346
        %v1381 = vmul.f32 %v1366, %v1347
        %v1382 = vmul.f32 %v1366, %v1348
        %v1383 = vsel %vm1350, %v1333, %v1367
        %v1384 = vsel %vm1351, %v1334, %v1368
        %v1385 = vsel %vm1352, %v1335, %v1369
        %v1386 = vsel %vm1353, %v1336, %v1370
        %v1387 = vsel %vm1354, %v1337, %v1371
        %v1388 = vsel %vm1355, %v1338, %v1372
        %v1389 = vsel %vm1356, %v1339, %v1373
        %v1390 = vsel %vm1357, %v1340, %v1374
        %v1391 = vsel %vm1358, %v1341, %v1375
        %v1392 = vsel %vm1359, %v1342, %v1376
        %v1393 = vsel %vm1360, %v1343, %v1377
        %v1394 = vsel %vm1361, %v1344, %v1378
        %v1395 = vsel %vm1362, %v1345, %v1379
        %v1396 = vsel %vm1363, %v1346, %v1380
        %v1397 = vsel %vm1364, %v1347, %v1381
        %v1398 = vsel %vm1365, %v1348, %v1382
        %v1399 = vadd.f32 %v1383, %v903
        %v1400 = vadd.f32 %v1384, %v904
        %v1401 = vadd.f32 %v1385, %v905
        %v1402 = vadd.f32 %v1386, %v906
        %v1403 = vadd.f32 %v1387, %v907
        %v1404 = vadd.f32 %v1388, %v908
        %v1405 = vadd.f32 %v1389, %v909
        %v1406 = vadd.f32 %v1390, %v910
        %v1407 = vadd.f32 %v1391, %v911
        %v1408 = vadd.f32 %v1392, %v912
        %v1409 = vadd.f32 %v1393, %v913
        %v1410 = vadd.f32 %v1394, %v914
        %v1411 = vadd.f32 %v1395, %v915
        %v1412 = vadd.f32 %v1396, %v916
        %v1413 = vadd.f32 %v1397, %v917
        %v1414 = vadd.f32 %v1398, %v918
        %v1415 = vpack.c.bf16 %v1400, %v1399
        %v1416 = vpack.c.bf16 %v1402, %v1401
        %v1417 = vpack.c.bf16 %v1404, %v1403
        %v1418 = vpack.c.bf16 %v1406, %v1405
        %v1419 = vpack.c.bf16 %v1408, %v1407
        %v1420 = vpack.c.bf16 %v1410, %v1409
        %v1421 = vpack.c.bf16 %v1412, %v1411
        %v1422 = vpack.c.bf16 %v1414, %v1413
        %v1423 = vld [vmem:[%s9] sm:$0xf]
        %v1424 = vld [vmem:[%s9 + $0x4] sm:$0xf]
        %v1425 = vld [vmem:[%s9 + $0x8] sm:$0xf]
        %v1426 = vld [vmem:[%s9 + $0xc] sm:$0xf]
        %v1427 = vld [vmem:[%s9 + $0x10] sm:$0xf]
        %v1428 = vld [vmem:[%s9 + $0x14] sm:$0xf]
        %v1429 = vld [vmem:[%s9 + $0x18] sm:$0xf]
        %v1430 = vld [vmem:[%s9 + $0x1c] sm:$0xf]
        %v1431 = vld [vmem:[%s9 + $0x20] sm:$0xf]
        %v1432 = vld [vmem:[%s9 + $0x24] sm:$0xf]
        %v1433 = vld [vmem:[%s9 + $0x28] sm:$0xf]
        %v1434 = vld [vmem:[%s9 + $0x2c] sm:$0xf]
        %v1435 = vld [vmem:[%s9 + $0x30] sm:$0xf]
        %v1436 = vld [vmem:[%s9 + $0x34] sm:$0xf]
        %v1437 = vld [vmem:[%s9 + $0x38] sm:$0xf]
        %v1438 = vld [vmem:[%s9 + $0x3c] sm:$0xf]
        %v1439 = vld [vmem:[%s10] sm:$0x1]
        %v1441 = vlaneseq
        %v1442 = vshrl.u32 %v1441, 7
        %v1443 = vsub.s32 0, %v1442
        %v1444 = vrot.slane %v1439, %v1443
        %v1462 = vunpack.c.l.b16 %v1423
        %v1463 = vunpack.c.l.b16 %v1424
        %v1464 = vunpack.c.l.b16 %v1425
        %v1465 = vunpack.c.l.b16 %v1426
        %v1466 = vunpack.c.l.b16 %v1427
        %v1467 = vunpack.c.l.b16 %v1428
        %v1468 = vunpack.c.l.b16 %v1429
        %v1469 = vunpack.c.l.b16 %v1430
        %v1470 = vunpack.c.l.b16 %v1431
        %v1471 = vunpack.c.l.b16 %v1432
        %v1472 = vunpack.c.l.b16 %v1433
        %v1473 = vunpack.c.l.b16 %v1434
        %v1474 = vunpack.c.l.b16 %v1435
        %v1475 = vunpack.c.l.b16 %v1436
        %v1476 = vunpack.c.l.b16 %v1437
        %v1477 = vunpack.c.l.b16 %v1438
        %v1478 = vpack.c.b16 %v1463, %v1462
        %v1479 = vpack.c.b16 %v1465, %v1464
        %v1480 = vpack.c.b16 %v1467, %v1466
        %v1481 = vpack.c.b16 %v1469, %v1468
        %v1482 = vpack.c.b16 %v1471, %v1470
        %v1483 = vpack.c.b16 %v1473, %v1472
        %v1484 = vpack.c.b16 %v1475, %v1474
        %v1485 = vpack.c.b16 %v1477, %v1476
        %1494 = vmatprep.subr.bf16.mxu0 0
        %1495 = vmatpush1.bf16.msra.mxu0 %v1478
        %1496 = vmatprep.subr.bf16.mxu0 0
        %1497 = vmatpush1.bf16.msra.mxu0 %v1479
        %1498 = vmatprep.subr.bf16.mxu0 0
        %1499 = vmatpush1.bf16.msra.mxu0 %v1480
        %1500 = vmatprep.subr.bf16.mxu0 0
        %1501 = vmatpush1.bf16.msra.mxu0 %v1481
        %1502 = vmatprep.subr.bf16.mxu0 0
        %1503 = vmatpush1.bf16.msra.mxu0 %v1482
        %1504 = vmatprep.subr.bf16.mxu0 0
        %1505 = vmatpush1.bf16.msra.mxu0 %v1483
        %1506 = vmatprep.subr.bf16.mxu0 0
        %1507 = vmatpush1.bf16.msra.mxu0 %v1484
        %1508 = vmatprep.subr.bf16.mxu0 0
        %1509 = vmatpush1.bf16.msra.mxu0 %v1485
        %1510 = vmatprep.subr.bf16.mxu0 0
        %1511 = vmatpush1.bf16.msra.mxu0 0
        %1512 = vmatprep.subr.bf16.mxu0 0
        %1513 = vmatpush1.bf16.msra.mxu0 0
        %1514 = vmatprep.subr.bf16.mxu0 0
        %1515 = vmatpush1.bf16.msra.mxu0 0
        %1516 = vmatprep.subr.bf16.mxu0 0
        %1517 = vmatpush1.bf16.msra.mxu0 0
        %1518 = vmatprep.subr.bf16.mxu0 0
        %1519 = vmatpush1.bf16.msra.mxu0 0
        %1520 = vmatprep.subr.bf16.mxu0 0
        %1521 = vmatpush1.bf16.msra.mxu0 0
        %1522 = vmatprep.subr.bf16.mxu0 0
        %1523 = vmatpush1.bf16.msra.mxu0 0
        %1524 = vmatprep.subr.bf16.mxu0 0
        %1525 = vmatpush1.bf16.msra.mxu0 0
        %1526 = vmatprep.mubr.bf16.mxu0 0
        %1527 = vmatmul.mubr.bf16.gmra.mrb[0].mxu0 %v1415
        %v1528 = vpop.f32.mrb[0].mxu0
        %v1529 = vadd.f32 %v1444, %v1528
        %v1530 = vpop.f32.mrb[0].mxu0
        %v1531 = vpop.f32.mrb[0].mxu0
        %v1532 = vadd.f32 %v1444, %v1531
        %v1533 = vpop.f32.mrb[0].mxu0
        %1534 = vmatprep.mubr.bf16.mxu0 0
        %1535 = vmatmul.mubr.bf16.gmra.mrb[0].mxu0 %v1416
        %v1536 = vpop.f32.mrb[0].mxu0
        %v1537 = vadd.f32 %v1444, %v1536
        %v1538 = vpop.f32.mrb[0].mxu0
        %v1539 = vpop.f32.mrb[0].mxu0
        %v1540 = vadd.f32 %v1444, %v1539
        %v1541 = vpop.f32.mrb[0].mxu0
        %1542 = vmatprep.mubr.bf16.mxu0 0
        %1543 = vmatmul.mubr.bf16.gmra.mrb[0].mxu0 %v1417
        %v1544 = vpop.f32.mrb[0].mxu0
        %v1545 = vadd.f32 %v1444, %v1544
        %v1546 = vpop.f32.mrb[0].mxu0
        %v1547 = vpop.f32.mrb[0].mxu0
        %v1548 = vadd.f32 %v1444, %v1547
        %v1549 = vpop.f32.mrb[0].mxu0
        %1550 = vmatprep.mubr.bf16.mxu0 0
        %1551 = vmatmul.mubr.bf16.gmra.mrb[0].mxu0 %v1418
        %v1552 = vpop.f32.mrb[0].mxu0
        %v1553 = vadd.f32 %v1444, %v1552
        %v1554 = vpop.f32.mrb[0].mxu0
        %v1555 = vpop.f32.mrb[0].mxu0
        %v1556 = vadd.f32 %v1444, %v1555
        %v1557 = vpop.f32.mrb[0].mxu0
        %1558 = vmatprep.mubr.bf16.mxu0 0
        %1559 = vmatmul.mubr.bf16.gmra.mrb[0].mxu0 %v1419
        %v1560 = vpop.f32.mrb[0].mxu0
        %v1561 = vadd.f32 %v1444, %v1560
        %v1562 = vpop.f32.mrb[0].mxu0
        %v1563 = vpop.f32.mrb[0].mxu0
        %v1564 = vadd.f32 %v1444, %v1563
        %v1565 = vpop.f32.mrb[0].mxu0
        %1566 = vmatprep.mubr.bf16.mxu0 0
        %1567 = vmatmul.mubr.bf16.gmra.mrb[0].mxu0 %v1420
        %v1568 = vpop.f32.mrb[0].mxu0
        %v1569 = vadd.f32 %v1444, %v1568
        %v1570 = vpop.f32.mrb[0].mxu0
        %v1571 = vpop.f32.mrb[0].mxu0
        %v1572 = vadd.f32 %v1444, %v1571
        %v1573 = vpop.f32.mrb[0].mxu0
        %1574 = vmatprep.mubr.bf16.mxu0 0
        %1575 = vmatmul.mubr.bf16.gmra.mrb[0].mxu0 %v1421
        %v1576 = vpop.f32.mrb[0].mxu0
        %v1577 = vadd.f32 %v1444, %v1576
        %v1578 = vpop.f32.mrb[0].mxu0
        %v1579 = vpop.f32.mrb[0].mxu0
        %v1580 = vadd.f32 %v1444, %v1579
        %v1581 = vpop.f32.mrb[0].mxu0
        %1582 = vmatprep.mubr.bf16.mxu0 0
        %1583 = vmatmul.mubr.bf16.gmra.mrb[0].mxu0 %v1422
        %v1584 = vpop.f32.mrb[0].mxu0
        %v1585 = vadd.f32 %v1444, %v1584
        %v1586 = vpop.f32.mrb[0].mxu0
        %v1587 = vpop.f32.mrb[0].mxu0
        %v1588 = vadd.f32 %v1444, %v1587
        %v1589 = vpop.f32.mrb[0].mxu0
        %1590 = vdwg.mxu0
        %v1591 = vmul.f32 %v1529, %v1529
        %v1592 = vmul.f32 %v1532, %v1532
        %v1593 = vmul.f32 %v1537, %v1537
        %v1594 = vmul.f32 %v1540, %v1540
        %v1595 = vmul.f32 %v1545, %v1545
        %v1596 = vmul.f32 %v1548, %v1548
        %v1597 = vmul.f32 %v1553, %v1553
        %v1598 = vmul.f32 %v1556, %v1556
        %v1599 = vmul.f32 %v1561, %v1561
        %v1600 = vmul.f32 %v1564, %v1564
        %v1601 = vmul.f32 %v1569, %v1569
        %v1602 = vmul.f32 %v1572, %v1572
        %v1603 = vmul.f32 %v1577, %v1577
        %v1604 = vmul.f32 %v1580, %v1580
        %v1605 = vmul.f32 %v1585, %v1585
        %v1606 = vmul.f32 %v1588, %v1588
        %1607 = vadd.xlane.f32.xlu0 %v1591
        %v1608 = vpop.xlane.xlu0 %1607
        %1609 = vadd.xlane.f32.xlu0 %v1592
        %v1610 = vpop.xlane.xlu0 %1609
        %1611 = vadd.xlane.f32.xlu0 %v1593
        %v1612 = vpop.xlane.xlu0 %1611
        %1613 = vadd.xlane.f32.xlu0 %v1594
        %v1614 = vpop.xlane.xlu0 %1613
        %1615 = vadd.xlane.f32.xlu0 %v1595
        %v1616 = vpop.xlane.xlu0 %1615
        %1617 = vadd.xlane.f32.xlu0 %v1596
        %v1618 = vpop.xlane.xlu0 %1617
        %1619 = vadd.xlane.f32.xlu0 %v1597
        %v1620 = vpop.xlane.xlu0 %1619
        %1621 = vadd.xlane.f32.xlu0 %v1598
        %v1622 = vpop.xlane.xlu0 %1621
        %1623 = vadd.xlane.f32.xlu0 %v1599
        %v1624 = vpop.xlane.xlu0 %1623
        %1625 = vadd.xlane.f32.xlu0 %v1600
        %v1626 = vpop.xlane.xlu0 %1625
        %1627 = vadd.xlane.f32.xlu0 %v1601
        %v1628 = vpop.xlane.xlu0 %1627
        %1629 = vadd.xlane.f32.xlu0 %v1602
        %v1630 = vpop.xlane.xlu0 %1629
        %1631 = vadd.xlane.f32.xlu0 %v1603
        %v1632 = vpop.xlane.xlu0 %1631
        %1633 = vadd.xlane.f32.xlu0 %v1604
        %v1634 = vpop.xlane.xlu0 %1633
        %1635 = vadd.xlane.f32.xlu0 %v1605
        %v1636 = vpop.xlane.xlu0 %1635
        %1637 = vadd.xlane.f32.xlu0 %v1606
        %v1638 = vpop.xlane.xlu0 %1637
        %v1639 = vmax.f32 %v1608, 1e-24
        %v1640 = vmax.f32 %v1610, 1e-24
        %v1641 = vmax.f32 %v1612, 1e-24
        %v1642 = vmax.f32 %v1614, 1e-24
        %v1643 = vmax.f32 %v1616, 1e-24
        %v1644 = vmax.f32 %v1618, 1e-24
        %v1645 = vmax.f32 %v1620, 1e-24
        %v1646 = vmax.f32 %v1622, 1e-24
        %v1647 = vmax.f32 %v1624, 1e-24
        %v1648 = vmax.f32 %v1626, 1e-24
        %v1649 = vmax.f32 %v1628, 1e-24
        %v1650 = vmax.f32 %v1630, 1e-24
        %v1651 = vmax.f32 %v1632, 1e-24
        %v1652 = vmax.f32 %v1634, 1e-24
        %v1653 = vmax.f32 %v1636, 1e-24
        %v1654 = vmax.f32 %v1638, 1e-24
        %v1655 = vrsqrt.pop %v1639
        %v1656 = vrsqrt.pop %v1640
        %v1657 = vrsqrt.pop %v1641
        %v1658 = vrsqrt.pop %v1642
        %v1659 = vrsqrt.pop %v1643
        %v1660 = vrsqrt.pop %v1644
        %v1661 = vrsqrt.pop %v1645
        %v1662 = vrsqrt.pop %v1646
        %v1663 = vrsqrt.pop %v1647
        %v1664 = vrsqrt.pop %v1648
        %v1665 = vrsqrt.pop %v1649
        %v1666 = vrsqrt.pop %v1650
        %v1667 = vrsqrt.pop %v1651
        %v1668 = vrsqrt.pop %v1652
        %v1669 = vrsqrt.pop %v1653
        %v1670 = vrsqrt.pop %v1654
        %v1671 = vmul.f32 %v1529, %v1655
        %v1672 = vmul.f32 %v1532, %v1656
        %v1673 = vmul.f32 %v1537, %v1657
        %v1674 = vmul.f32 %v1540, %v1658
        %v1675 = vmul.f32 %v1545, %v1659
        %v1676 = vmul.f32 %v1548, %v1660
        %v1677 = vmul.f32 %v1553, %v1661
        %v1678 = vmul.f32 %v1556, %v1662
        %v1679 = vmul.f32 %v1561, %v1663
        %v1680 = vmul.f32 %v1564, %v1664
        %v1681 = vmul.f32 %v1569, %v1665
        %v1682 = vmul.f32 %v1572, %v1666
        %v1683 = vmul.f32 %v1577, %v1667
        %v1684 = vmul.f32 %v1580, %v1668
        %v1685 = vmul.f32 %v1585, %v1669
        %v1686 = vmul.f32 %v1588, %v1670
        %1687 = vst [vmem:[%s421] sm:$0xff] %v1671
        %1688 = vst [vmem:[%s421 + $0x8] sm:$0xff] %v1672
        %1689 = vst [vmem:[%s421 + $0x10] sm:$0xff] %v1673
        %1690 = vst [vmem:[%s421 + $0x18] sm:$0xff] %v1674
        %1691 = vst [vmem:[%s421 + $0x20] sm:$0xff] %v1675
        %1692 = vst [vmem:[%s421 + $0x28] sm:$0xff] %v1676
        %1693 = vst [vmem:[%s421 + $0x30] sm:$0xff] %v1677
        %1694 = vst [vmem:[%s421 + $0x38] sm:$0xff] %v1678
        %1695 = vst [vmem:[%s421 + $0x40] sm:$0xff] %v1679
        %1696 = vst [vmem:[%s421 + $0x48] sm:$0xff] %v1680
        %1697 = vst [vmem:[%s421 + $0x50] sm:$0xff] %v1681
        %1698 = vst [vmem:[%s421 + $0x58] sm:$0xff] %v1682
        %1699 = vst [vmem:[%s421 + $0x60] sm:$0xff] %v1683
        %1700 = vst [vmem:[%s421 + $0x68] sm:$0xff] %v1684
        %1701 = vst [vmem:[%s421 + $0x70] sm:$0xff] %v1685
        %1702 = vst [vmem:[%s421 + $0x78] sm:$0xff] %v1686
        %s1703 = sand.u32 %s292, 1
        %s1704 = scalar_lea.sflag [#allocation3], %s1703
        %s1705 = sand.u32 %s292, 1
        %s1706 = smul.addr %s1705, 128
        %s1707 = scalar_lea.vmem [#allocation5], %s1706
        // Predicated region
        $region73: #{encoder_cfg_forward.1} parent=67 // pred_check
          %p1708 = pneg %p302
        $region74: #{encoder_cfg_forward.1} parent=67 // pred_check_branch
          %1710 = sbr.rel (%p1708) target = $region76
        $region75: #{encoder_cfg_forward.1} parent=67 // pred_region
          %s1711 = smul.u32 16, %s27
          %s1713 = ssub.s32 2048, 2048
          %1714 = vsyncadd %s1704, %s1713
          %s1715 = smul.addr %s1711, 128
          %s1716 = scalar_lea.hbm %s12, %s1715
          %s1717 = sshll.u32 %s1707, 4
          %s1718 = int_to_ptr.vmem [resolvable:$true] %s1717
          %1723 = dma.vmem_to_hbm [thread:$0]  %s1718, 2048, %s1716, %s1704, 128, 128, 8
        $region76: #{encoder_cfg_forward.1} parent=67 // pred_fallthru
          _
      $region68: #{encoder_cfg_forward.1} parent=5 // pred_fallthru
        _
      %p1724 = scmp.le.s32.totalorder 2, %s22
      // Predicated region
      $region77: #{encoder_cfg_forward.1} parent=5 // pred_check
        %p1725 = pneg %p1724
      $region78: #{encoder_cfg_forward.1} parent=5 // pred_check_branch
        %1727 = sbr.rel (%p1725) target = $region80
      $region79: #{encoder_cfg_forward.1} parent=5 // pred_region
        %s1728 = ssub.s32 %s22, 2
        // Predicated region
        $region81: #{encoder_cfg_forward.1} parent=79 // pred_check
          %p1729 = pneg %p308
        $region82: #{encoder_cfg_forward.1} parent=79 // pred_check_branch
          %1731 = sbr.rel (%p1729) target = $region84
        $region83: #{encoder_cfg_forward.1} parent=79 // pred_region
          %s1732 = sand.u32 %s293, 1
          %s1733 = scalar_lea.sflag [#allocation3], %s1732
          %s1734 = sand.u32 %s293, 1
          %s1735 = smul.addr %s1734, 128
          %s1736 = scalar_lea.vmem [#allocation5], %s1735
          %1737 = dma.done %s1733, 2048
        $region84: #{encoder_cfg_forward.1} parent=79 // pred_fallthru
          _
      $region80: #{encoder_cfg_forward.1} parent=5 // pred_fallthru
        _
    $region6: #{encoder_cfg_forward.1} parent=1 // loop_footer
      %s26 = sadd.s32 1, %s22
    $region7: #{encoder_cfg_forward.1} parent=1 // loop_footer_branch
      %21 = sbr.rel target = $region3
    $region8: #{encoder_cfg_forward.1} parent=1 // loop_exit
      _
    %1738 = vsyncpa [#allocation3], 1
    %s1739 = scalar_lea.sflag [#allocation3], 1
    %1740 = vsyncpa %s1739, 1
    %1741 = vsyncpa [#allocation4], 1
    %s1742 = scalar_lea.sflag [#allocation4], 1
    %1743 = vsyncpa %s1742, 1

</llo_original>
